<compile_context>
chip_gen: v5e
topology: v5e:2x2
jax: 0.10.0
libtpu: 0.0.40
codegen_flags: <defaults>
</compile_context>

<pallas_src>
import functools

import jax
import jax.numpy as jnp
from jax.experimental import pallas as pl
from jax.experimental.pallas import tpu as pltpu


def _neufa_kernel(spec_l_ref, spec_t_ref, tok_ref, tgt_ref, w1_ref, w2_ref,
                  r_ref, out_ref, *, n_vocab_chunks, vocab_chunk):
    # ---------- spectrum: raw sum of squared error on a lane-dense tile ------
    d = spec_l_ref[...].astype(jnp.float32) - spec_t_ref[...].astype(jnp.float32)
    spec_sum = jnp.sum(d * d)

    # ---------- token CE on this T1-tile: sum(logsumexp - picked logit) ------
    tgt = tgt_ref[...]                                    # (tq, 1) int32
    if n_vocab_chunks == 1:
        x = tok_ref[...].astype(jnp.float32)              # (tq, V)
        m = jnp.max(x, axis=-1, keepdims=True)
        s = jnp.sum(jnp.exp(x - m), axis=-1, keepdims=True)
        iota = jax.lax.broadcasted_iota(jnp.int32, x.shape, 1)
        picked = jnp.sum(jnp.where(iota == tgt, x, 0.0), axis=-1, keepdims=True)
    else:
        tq = tgt.shape[0]

        def body(c, carry):
            m, s, picked = carry
            off = pl.multiple_of(c * vocab_chunk, 128)
            x = tok_ref[:, pl.ds(off, vocab_chunk)].astype(jnp.float32)
            iota = jax.lax.broadcasted_iota(jnp.int32, x.shape, 1) + off
            picked = picked + jnp.sum(jnp.where(iota == tgt, x, 0.0),
                                      axis=-1, keepdims=True)
            cm = jnp.max(x, axis=-1, keepdims=True)
            m_new = jnp.maximum(m, cm)
            s = s * jnp.exp(m - m_new) + jnp.sum(jnp.exp(x - m_new),
                                                 axis=-1, keepdims=True)
            return m_new, s, picked

        init = (jnp.full((tq, 1), -jnp.inf, dtype=jnp.float32),
                jnp.zeros((tq, 1), dtype=jnp.float32),
                jnp.zeros((tq, 1), dtype=jnp.float32))
        m, s, picked = jax.lax.fori_loop(0, n_vocab_chunks, body, init)
    tok_sum = jnp.sum(m + jnp.log(s) - picked)

    # ---------- attention: sum(max(w1^T, w2) * r) on this (tq, T2) tile ------
    # w1 tile is (T2, tq) with tq a multiple of 128 (or full T1): the XLU
    # transpose lowers cleanly without relayout copies.
    w1t = jnp.transpose(w1_ref[...].astype(jnp.float32))  # (tq, T2)
    w2b = w2_ref[...].astype(jnp.float32)                  # (tq, T2)
    attn_sum = jnp.sum(jnp.maximum(w1t, w2b) * r_ref[...])

    # ---------- single lane-dense (8,128) output block, one unmasked store ---
    row = jax.lax.broadcasted_iota(jnp.int32, (8, 128), 0)
    out_ref[...] = jnp.where(
        row == 0, spec_sum,
        jnp.where(row == 1, tok_sum,
                  jnp.where(row == 2, attn_sum, 0.0)))


def _pick_time_tiles(T1, spec_rows, max_tiles):
    """Largest NT <= max_tiles with T1/NT a multiple of 128 (keeps the w1 tile's
    minor dim 128-aligned) and spec_rows/NT a multiple of 8."""
    best = 1
    for nt in range(2, max_tiles + 1):
        if (T1 % nt == 0 and (T1 // nt) % 128 == 0
                and spec_rows % nt == 0 and (spec_rows // nt) % 8 == 0):
            best = nt
    return best


def _pick_vocab_chunk(V, target):
    """Largest 128-aligned divisor of V that is <= target (else the whole V)."""
    if V <= target:
        return V
    for c in range(target, 127, -1):
        if V % c == 0 and c % 128 == 0:
            return c
    return V


def neufa_loss(spectrum_logits, spectrum_targets, tokens_logits, tokens_targets,
               w1, w2, *, token_loss_weight=0.1, spectrum_loss_weight=1.0,
               attention_loss_weight=0.001, attention_loss_alpha=0.5,
               max_time_tiles=8, vocab_chunk_target=2048,
               vmem_limit_bytes=64 * 1024 * 1024):
    B, T2, n_mels = spectrum_logits.shape
    _, T1, V = tokens_logits.shape

    # r-map is detached in the reference (no gradient) -> precompute once,
    # mirroring the torch formula exactly (flips included), in f32.
    lin1 = jnp.linspace(1e-6, 1.0, T1, dtype=jnp.float32)
    lin2 = jnp.linspace(1e-6, 1.0, T2, dtype=jnp.float32)
    a = jnp.broadcast_to(lin1[:, None], (T1, T2))
    b = jnp.broadcast_to(lin2[None, :], (T1, T2))
    r1 = jnp.maximum(a / b, b / a)
    r2 = jnp.maximum(jnp.flip(a, 1) / jnp.flip(b, 0), jnp.flip(b, 0) / jnp.flip(a, 1))
    r = jnp.tanh(attention_loss_alpha * (jnp.maximum(r1, r2) - 1.0))

    # Lane-dense spectrum layout: the MSE term is purely elementwise, so a
    # contiguous reshape to 128-wide rows is semantically free.
    N = T2 * n_mels
    if N % 128 == 0:
        spec_rows, spec_lanes = N // 128, 128
    else:
        spec_rows, spec_lanes = T2, n_mels          # fallback (lane-padded)
    spec_l = spectrum_logits.reshape(B, spec_rows, spec_lanes)
    spec_t = spectrum_targets.reshape(B, spec_rows, spec_lanes)

    NT = _pick_time_tiles(T1, spec_rows, max_time_tiles)
    tq = T1 // NT                  # T1 rows (tokens/w2/r) & w1 columns per tile
    rpt = spec_rows // NT          # lane-dense spectrum rows per tile

    vocab_chunk = _pick_vocab_chunk(V, vocab_chunk_target)
    n_vocab_chunks = V // vocab_chunk

    # Class indices as a [B, T1, 1] int32 column (tiny; lives in VMEM).
    tgt = tokens_targets.astype(jnp.int32)[..., None]

    kernel = functools.partial(_neufa_kernel, n_vocab_chunks=n_vocab_chunks,
                               vocab_chunk=vocab_chunk)

    parts = pl.pallas_call(
        kernel,
        grid=(NT, B),   # time tiles outer, batch inner; each step is independent
        in_specs=[
            pl.BlockSpec((None, rpt, spec_lanes), lambda j, i: (i, j, 0)),  # spec logits
            pl.BlockSpec((None, rpt, spec_lanes), lambda j, i: (i, j, 0)),  # spec targets
            pl.BlockSpec((None, tq, V), lambda j, i: (i, j, 0)),            # tokens_logits
            pl.BlockSpec((None, tq, 1), lambda j, i: (i, j, 0)),            # targets
            pl.BlockSpec((None, T2, tq), lambda j, i: (i, 0, j)),           # w1 (native)
            pl.BlockSpec((None, tq, T2), lambda j, i: (i, j, 0)),           # w2
            pl.BlockSpec((tq, T2), lambda j, i: (j, 0)),                    # r tile
        ],
        out_specs=pl.BlockSpec((None, None, 8, 128), lambda j, i: (j, i, 0, 0)),
        out_shape=jax.ShapeDtypeStruct((NT, B, 8, 128), jnp.float32),
        compiler_params=pltpu.CompilerParams(
            dimension_semantics=("parallel", "parallel"),
            vmem_limit_bytes=vmem_limit_bytes,
        ),
    )(spec_l, spec_t, tokens_logits, tgt, w1, w2, r)

    # Finalize once: sum the per-(tile, batch) partial sums, apply 1/N + weights.
    spec_total = jnp.sum(parts[:, :, 0, 0])
    tok_total = jnp.sum(parts[:, :, 1, 0])
    attn_total = jnp.sum(parts[:, :, 2, 0])

    spectrum_loss = spec_total / (B * T2 * n_mels)
    token_loss = tok_total / (B * T1)
    attention_loss = attn_total / (B * T1 * T2)
    return (spectrum_loss_weight * spectrum_loss
            + token_loss_weight * token_loss
            + attention_loss_weight * attention_loss)


def _neufa_loss_reference(spectrum_logits, spectrum_targets, tokens_logits,
                          tokens_targets, w1, w2, *, token_loss_weight=0.1,
                          spectrum_loss_weight=1.0, attention_loss_weight=0.001,
                          attention_loss_alpha=0.5):
    sl = spectrum_logits.astype(jnp.float32)
    st = spectrum_targets.astype(jnp.float32)
    spectrum_loss = jnp.mean((sl - st) ** 2)

    logits = tokens_logits.astype(jnp.float32)
    logp = jax.nn.log_softmax(logits, axis=-1)
    picked = jnp.take_along_axis(logp, tokens_targets[..., None].astype(jnp.int32),
                                 axis=-1)
    token_loss = -jnp.mean(picked)

    T1, T2 = w2.shape[1], w2.shape[2]
    lin1 = jnp.linspace(1e-6, 1.0, T1, dtype=jnp.float32)
    lin2 = jnp.linspace(1e-6, 1.0, T2, dtype=jnp.float32)
    a = jnp.broadcast_to(lin1[:, None], (T1, T2))
    b = jnp.broadcast_to(lin2[None, :], (T1, T2))
    r1 = jnp.maximum(a / b, b / a)
    r2 = jnp.maximum(jnp.flip(a, 1) / jnp.flip(b, 0), jnp.flip(b, 0) / jnp.flip(a, 1))
    r = jnp.tanh(attention_loss_alpha * (jnp.maximum(r1, r2) - 1.0))
    w = jnp.maximum(jnp.swapaxes(w1.astype(jnp.float32), 1, 2),
                    w2.astype(jnp.float32))
    attention_loss = jnp.mean(w * r[None])
    return (spectrum_loss_weight * spectrum_loss
            + token_loss_weight * token_loss
            + attention_loss_weight * attention_loss)


if __name__ == "__main__":
    key = jax.random.PRNGKey(0)
    k1, k2, k3, k4, k5, k6 = jax.random.split(key, 6)

    # Shapes chosen so the test exercises the time-tiling (NT=2) and the
    # chunked-vocab CE path (2 chunks of 256), while staying small.
    B, T1, T2, n_mels, vocab = 2, 256, 256, 32, 512

    # Producer emits bf16 for the large tensors (no wrapper cast -> no extra
    # HBM pass); the kernel upcasts to f32 after load.
    spectrum_logits = jax.random.normal(k1, (B, T2, n_mels)).astype(jnp.bfloat16)
    spectrum_targets = jax.random.normal(k2, (B, T2, n_mels)).astype(jnp.bfloat16)
    tokens_logits = jax.random.normal(k3, (B, T1, vocab)).astype(jnp.bfloat16)
    tokens_targets = jax.random.randint(k4, (B, T1), 0, vocab, dtype=jnp.int32)
    w1 = jax.nn.softmax(jax.random.normal(k5, (B, T2, T1)), axis=-1).astype(jnp.bfloat16)
    w2 = jax.nn.softmax(jax.random.normal(k6, (B, T1, T2)), axis=-1).astype(jnp.bfloat16)

    loss = neufa_loss(spectrum_logits, spectrum_targets, tokens_logits,
                      tokens_targets, w1, w2, vocab_chunk_target=256)
    jax.block_until_ready(loss)

    ref = _neufa_loss_reference(spectrum_logits, spectrum_targets, tokens_logits,
                                tokens_targets, w1, w2)
    assert jnp.allclose(loss, ref, rtol=1e-4, atol=1e-4), (loss, ref)

    print("KERNEL_OK")
</pallas_src>

<mosaic_0001>
module attributes {stable_mosaic.version = 11 : i64} {
  func.func @_neufa_kernel(%arg0: i32, %arg1: i32, %arg2: memref<1x32x128xbf16, #tpu.memory_space<vmem>>, %arg3: memref<1x32x128xbf16, #tpu.memory_space<vmem>>, %arg4: memref<1x128x512xbf16, #tpu.memory_space<vmem>>, %arg5: memref<1x128x1xi32, #tpu.memory_space<vmem>>, %arg6: memref<1x256x128xbf16, #tpu.memory_space<vmem>>, %arg7: memref<1x128x256xbf16, #tpu.memory_space<vmem>>, %arg8: memref<128x256xf32, #tpu.memory_space<vmem>>, %arg9: memref<1x1x8x128xf32, #tpu.memory_space<vmem>>) attributes {dimension_semantics = [#tpu.dimension_semantics<parallel>, #tpu.dimension_semantics<parallel>], iteration_bounds = array<i64: 2, 2>, scalar_prefetch = 0 : i64, scratch_operands = 0 : i64, tpu.core_type = #tpu.core_type<tc>, window_params = [{transform_indices = @transform_0, window_bounds = array<i64: 1, 32, 128>}, {transform_indices = @transform_1, window_bounds = array<i64: 1, 32, 128>}, {transform_indices = @transform_2, window_bounds = array<i64: 1, 128, 512>}, {transform_indices = @transform_3, window_bounds = array<i64: 1, 128, 1>}, {transform_indices = @transform_4, window_bounds = array<i64: 1, 256, 128>}, {transform_indices = @transform_5, window_bounds = array<i64: 1, 128, 256>}, {transform_indices = @transform_6, window_bounds = array<i64: 128, 256>}, {transform_indices = @transform_7, window_bounds = array<i64: 1, 1, 8, 128>}]} {
    %c0 = arith.constant 0 : index
    %c0_0 = arith.constant 0 : index
    %c0_1 = arith.constant 0 : index
    %0 = vector.load %arg2[%c0, %c0_0, %c0_1] : memref<1x32x128xbf16, #tpu.memory_space<vmem>>, vector<1x32x128xbf16>
    %1 = vector.shape_cast %0 : vector<1x32x128xbf16> to vector<32x128xbf16>
    %2 = arith.extf %1 : vector<32x128xbf16> to vector<32x128xf32>
    %c0_2 = arith.constant 0 : index
    %c0_3 = arith.constant 0 : index
    %c0_4 = arith.constant 0 : index
    %3 = vector.load %arg3[%c0_2, %c0_3, %c0_4] : memref<1x32x128xbf16, #tpu.memory_space<vmem>>, vector<1x32x128xbf16>
    %4 = vector.shape_cast %3 : vector<1x32x128xbf16> to vector<32x128xbf16>
    %5 = arith.extf %4 : vector<32x128xbf16> to vector<32x128xf32>
    %6 = arith.subf %2, %5 : vector<32x128xf32>
    %7 = arith.mulf %6, %6 : vector<32x128xf32>
    %8 = vector.shape_cast %7 : vector<32x128xf32> to vector<1x32x128xf32>
    %cst = arith.constant dense<0.000000e+00> : vector<1xf32>
    %9 = vector.multi_reduction <add>, %8, %cst [1, 2] : vector<1x32x128xf32> to vector<1xf32>
    %10 = vector.shape_cast %9 : vector<1xf32> to vector<1x1x1xf32>
    %11 = vector.extract %10[0, 0, 0] : f32 from vector<1x1x1xf32>
    %c0_5 = arith.constant 0 : index
    %c0_6 = arith.constant 0 : index
    %c0_7 = arith.constant 0 : index
    %12 = vector.load %arg5[%c0_5, %c0_6, %c0_7] : memref<1x128x1xi32, #tpu.memory_space<vmem>>, vector<1x128x1xi32>
    %13 = vector.shape_cast %12 : vector<1x128x1xi32> to vector<128x1xi32>
    %cst_8 = arith.constant 0xFF800000 : f32
    %14 = vector.broadcast %cst_8 : f32 to vector<128x1xf32>
    %cst_9 = arith.constant 0.000000e+00 : f32
    %15 = vector.broadcast %cst_9 : f32 to vector<128x1xf32>
    %cst_10 = arith.constant 0.000000e+00 : f32
    %16 = vector.broadcast %cst_10 : f32 to vector<128x1xf32>
    %c0_i32 = arith.constant 0 : i32
    %c2_i32 = arith.constant 2 : i32
    %17 = arith.addi %c0_i32, %c2_i32 : i32
    %c1_i32 = arith.constant 1 : i32
    %18:3 = scf.for %arg10 = %c0_i32 to %17 step %c1_i32 iter_args(%arg11 = %14, %arg12 = %15, %arg13 = %16) -> (vector<128x1xf32>, vector<128x1xf32>, vector<128x1xf32>)  : i32 {
      %c256_i32 = arith.constant 256 : i32
      %57 = arith.muli %arg10, %c256_i32 : i32
      %58 = tpu.assume_multiple %57, 128 : i32
      %c0_30 = arith.constant 0 : index
      %c0_31 = arith.constant 0 : index
      %59 = arith.index_cast %58 : i32 to index
      %60 = vector.load %arg4[%c0_30, %c0_31, %59] : memref<1x128x512xbf16, #tpu.memory_space<vmem>>, vector<1x128x256xbf16>
      %61 = vector.shape_cast %60 : vector<1x128x256xbf16> to vector<128x256xbf16>
      %62 = arith.extf %61 : vector<128x256xbf16> to vector<128x256xf32>
      %63 = tpu.iota {dimensions = array<i32: 1>} : vector<128x256xi32>
      %64 = vector.broadcast %58 : i32 to vector<128x256xi32>
      %65 = arith.addi %63, %64 : vector<128x256xi32>
      %66 = vector.broadcast %13 : vector<128x1xi32> to vector<128x256xi32>
      %67 = arith.cmpi eq, %65, %66 : vector<128x256xi32>
      %cst_32 = arith.constant 0.000000e+00 : f32
      %68 = vector.broadcast %cst_32 : f32 to vector<128x256xf32>
      %69 = arith.select %67, %62, %68 : vector<128x256xi1>, vector<128x256xf32>
      %cst_33 = arith.constant dense<0.000000e+00> : vector<128xf32>
      %70 = vector.multi_reduction <add>, %69, %cst_33 [1] : vector<128x256xf32> to vector<128xf32>
      %71 = vector.shape_cast %70 : vector<128xf32> to vector<128x1xf32>
      %72 = arith.addf %arg13, %71 : vector<128x1xf32>
      %cst_34 = arith.constant dense<0xFF800000> : vector<128xf32>
      %73 = vector.multi_reduction <maximumf>, %62, %cst_34 [1] : vector<128x256xf32> to vector<128xf32>
      %74 = vector.shape_cast %73 : vector<128xf32> to vector<128x1xf32>
      %75 = arith.maximumf %arg11, %74 : vector<128x1xf32>
      %76 = arith.subf %arg11, %75 : vector<128x1xf32>
      %77 = math.exp %76 : vector<128x1xf32>
      %78 = arith.mulf %arg12, %77 : vector<128x1xf32>
      %79 = vector.broadcast %75 : vector<128x1xf32> to vector<128x256xf32>
      %80 = arith.subf %62, %79 : vector<128x256xf32>
      %81 = math.exp %80 : vector<128x256xf32>
      %cst_35 = arith.constant dense<0.000000e+00> : vector<128xf32>
      %82 = vector.multi_reduction <add>, %81, %cst_35 [1] : vector<128x256xf32> to vector<128xf32>
      %83 = vector.shape_cast %82 : vector<128xf32> to vector<128x1xf32>
      %84 = arith.addf %78, %83 : vector<128x1xf32>
      scf.yield %75, %84, %72 : vector<128x1xf32>, vector<128x1xf32>, vector<128x1xf32>
    }
    %c2_i32_11 = arith.constant 2 : i32
    %19 = math.log %18#1 : vector<128x1xf32>
    %20 = arith.addf %18#0, %19 : vector<128x1xf32>
    %21 = arith.subf %20, %18#2 : vector<128x1xf32>
    %22 = vector.shape_cast %21 : vector<128x1xf32> to vector<1x128x1xf32>
    %cst_12 = arith.constant dense<0.000000e+00> : vector<1xf32>
    %23 = vector.multi_reduction <add>, %22, %cst_12 [1, 2] : vector<1x128x1xf32> to vector<1xf32>
    %24 = vector.shape_cast %23 : vector<1xf32> to vector<1x1x1xf32>
    %25 = vector.extract %24[0, 0, 0] : f32 from vector<1x1x1xf32>
    %c0_13 = arith.constant 0 : index
    %c0_14 = arith.constant 0 : index
    %c0_15 = arith.constant 0 : index
    %26 = vector.load %arg6[%c0_13, %c0_14, %c0_15] : memref<1x256x128xbf16, #tpu.memory_space<vmem>>, vector<1x256x128xbf16>
    %27 = vector.shape_cast %26 : vector<1x256x128xbf16> to vector<256x128xbf16>
    %28 = arith.extf %27 : vector<256x128xbf16> to vector<256x128xf32>
    %29 = tpu.transpose %28, [1, 0] : vector<256x128xf32> -> vector<128x256xf32>
    %c0_16 = arith.constant 0 : index
    %c0_17 = arith.constant 0 : index
    %c0_18 = arith.constant 0 : index
    %30 = vector.load %arg7[%c0_16, %c0_17, %c0_18] : memref<1x128x256xbf16, #tpu.memory_space<vmem>>, vector<1x128x256xbf16>
    %31 = vector.shape_cast %30 : vector<1x128x256xbf16> to vector<128x256xbf16>
    %32 = arith.extf %31 : vector<128x256xbf16> to vector<128x256xf32>
    %33 = arith.maximumf %29, %32 : vector<128x256xf32>
    %c0_19 = arith.constant 0 : index
    %c0_20 = arith.constant 0 : index
    %34 = vector.load %arg8[%c0_19, %c0_20] : memref<128x256xf32, #tpu.memory_space<vmem>>, vector<128x256xf32>
    %35 = arith.mulf %33, %34 : vector<128x256xf32>
    %36 = vector.shape_cast %35 : vector<128x256xf32> to vector<1x128x256xf32>
    %cst_21 = arith.constant dense<0.000000e+00> : vector<1xf32>
    %37 = vector.multi_reduction <add>, %36, %cst_21 [1, 2] : vector<1x128x256xf32> to vector<1xf32>
    %38 = vector.shape_cast %37 : vector<1xf32> to vector<1x1x1xf32>
    %39 = vector.extract %38[0, 0, 0] : f32 from vector<1x1x1xf32>
    %40 = tpu.iota {dimensions = array<i32: 0>} : vector<8x128xi32>
    %c0_i32_22 = arith.constant 0 : i32
    %41 = vector.broadcast %c0_i32_22 : i32 to vector<8x128xi32>
    %42 = arith.cmpi eq, %40, %41 : vector<8x128xi32>
    %c1_i32_23 = arith.constant 1 : i32
    %43 = vector.broadcast %c1_i32_23 : i32 to vector<8x128xi32>
    %44 = arith.cmpi eq, %40, %43 : vector<8x128xi32>
    %c2_i32_24 = arith.constant 2 : i32
    %45 = vector.broadcast %c2_i32_24 : i32 to vector<8x128xi32>
    %46 = arith.cmpi eq, %40, %45 : vector<8x128xi32>
    %cst_25 = arith.constant 0.000000e+00 : f32
    %47 = vector.broadcast %39 : f32 to vector<8x128xf32>
    %48 = vector.broadcast %cst_25 : f32 to vector<8x128xf32>
    %49 = arith.select %46, %47, %48 : vector<8x128xi1>, vector<8x128xf32>
    %50 = vector.broadcast %25 : f32 to vector<8x128xf32>
    %51 = arith.select %44, %50, %49 : vector<8x128xi1>, vector<8x128xf32>
    %52 = vector.broadcast %11 : f32 to vector<8x128xf32>
    %53 = arith.select %42, %52, %51 : vector<8x128xi1>, vector<8x128xf32>
    %c0_26 = arith.constant 0 : index
    %c0_27 = arith.constant 0 : index
    %c0_28 = arith.constant 0 : index
    %c0_29 = arith.constant 0 : index
    %54 = vector.load %arg9[%c0_26, %c0_27, %c0_28, %c0_29] : memref<1x1x8x128xf32, #tpu.memory_space<vmem>>, vector<1x1x8x128xf32>
    %55 = vector.shape_cast %54 : vector<1x1x8x128xf32> to vector<8x128xf32>
    %56 = vector.shape_cast %53 : vector<8x128xf32> to vector<1x1x8x128xf32>
    tpu.vector_store %arg9[%c0_26, %c0_27, %c0_28, %c0_29], %56 {strides = array<i32>} : memref<1x1x8x128xf32, #tpu.memory_space<vmem>>, vector<1x1x8x128xf32>,
    return
  }
  func.func @transform_0(%arg0: i32, %arg1: i32) -> (i32, i32, i32) {
    %c0_i32 = arith.constant 0 : i32
    %c0_i32_0 = arith.constant 0 : i32
    return %arg1, %arg0, %c0_i32 : i32, i32, i32
  }
  func.func @transform_1(%arg0: i32, %arg1: i32) -> (i32, i32, i32) {
    %c0_i32 = arith.constant 0 : i32
    %c0_i32_0 = arith.constant 0 : i32
    return %arg1, %arg0, %c0_i32 : i32, i32, i32
  }
  func.func @transform_2(%arg0: i32, %arg1: i32) -> (i32, i32, i32) {
    %c0_i32 = arith.constant 0 : i32
    %c0_i32_0 = arith.constant 0 : i32
    return %arg1, %arg0, %c0_i32 : i32, i32, i32
  }
  func.func @transform_3(%arg0: i32, %arg1: i32) -> (i32, i32, i32) {
    %c0_i32 = arith.constant 0 : i32
    %c0_i32_0 = arith.constant 0 : i32
    return %arg1, %arg0, %c0_i32 : i32, i32, i32
  }
  func.func @transform_4(%arg0: i32, %arg1: i32) -> (i32, i32, i32) {
    %c0_i32 = arith.constant 0 : i32
    %c0_i32_0 = arith.constant 0 : i32
    return %arg1, %c0_i32, %arg0 : i32, i32, i32
  }
  func.func @transform_5(%arg0: i32, %arg1: i32) -> (i32, i32, i32) {
    %c0_i32 = arith.constant 0 : i32
    %c0_i32_0 = arith.constant 0 : i32
    return %arg1, %arg0, %c0_i32 : i32, i32, i32
  }
  func.func @transform_6(%arg0: i32, %arg1: i32) -> (i32, i32) {
    %c0_i32 = arith.constant 0 : i32
    %c0_i32_0 = arith.constant 0 : i32
    return %arg0, %c0_i32 : i32, i32
  }
  func.func @transform_7(%arg0: i32, %arg1: i32) -> (i32, i32, i32, i32) {
    %c0_i32 = arith.constant 0 : i32
    %c0_i32_0 = arith.constant 0 : i32
    %c0_i32_1 = arith.constant 0 : i32
    return %arg0, %arg1, %c0_i32, %c0_i32_0 : i32, i32, i32, i32
  }
}

</mosaic_0001>

<llo_original>
// kernel: tpu_custom_call.1
$region0: #{tpu_custom_call.1}
  #allocation0 [shape = 'u32[]', space=smem, size = 0x4, offset = 0x4, fixed_abs, tag = 'smem constant byte address 0x4 - core index']
  #allocation1 [shape = 'u32[72,128]{1,0:T(1,128)}', space=vmem, size = 0x9000, scoped, tag = 'internal scratch']
  %s0 = inlined_call_operand.hbm [shape: bf16[2,64,128], index: 0, kind: input, shape index: {}]
  %s1 = inlined_call_operand.hbm [shape: bf16[2,64,128], index: 1, kind: input, shape index: {}]
  %s2 = inlined_call_operand.hbm [shape: bf16[2,256,512], index: 2, kind: input, shape index: {}]
  %s3 = inlined_call_operand.vmem [shape: s32[2,256,1], index: 3, kind: input, shape index: {}]
  %s4 = inlined_call_operand.vmem [shape: bf16[2,256,256], index: 4, kind: input, shape index: {}]
  %s5 = inlined_call_operand.hbm [shape: bf16[2,256,256], index: 5, kind: input, shape index: {}]
  %s6 = inlined_call_operand.hbm [shape: f32[256,256], index: 6, kind: input, shape index: {}]
  %s7 = inlined_call_operand.hbm [shape: f32[2,2,8,128], index: 7, kind: output, shape index: {}]
  %s8 = sld [smem:[#allocation0]]
  $region129: #{tpu_custom_call.1} parent=0
    _
  %s10 = ssub.s32 1, %s8
  %s11 = scalar_select 0, %s10, %s8
  $region1: #{tpu_custom_call.1} parent=0
    #allocation2 [shape = 'u8[16384]{0}', space=vmem, size = 0x4000, scoped, tag = 'input window, operand 0']
    #allocation3 [shape = 's32[2]{0}', space=sflag, size = 0x8, scoped, tag = 'scoped memory for tpu_custom_call.1']
    #allocation4 [shape = 's32[2]{0}', space=sflag, size = 0x8, scoped, tag = 'scoped memory for tpu_custom_call.1']
    #allocation5 [shape = 'u8[16384]{0}', space=vmem, size = 0x4000, scoped, tag = 'input window, operand 1']
    #allocation6 [shape = 's32[2]{0}', space=sflag, size = 0x8, scoped, tag = 'scoped memory for tpu_custom_call.1']
    #allocation7 [shape = 'u8[262144]{0}', space=vmem, size = 0x40000, scoped, tag = 'input window, operand 2']
    #allocation8 [shape = 'u8[131072]{0}', space=vmem, size = 0x20000, scoped, tag = 'input window, operand 4']
    #allocation9 [shape = 'u8[131072]{0}', space=vmem, size = 0x20000, scoped, tag = 'input window, operand 5']
    #allocation10 [shape = 's32[2]{0}', space=sflag, size = 0x8, scoped, tag = 'scoped memory for tpu_custom_call.1']
    #allocation11 [shape = 'u8[262144]{0}', space=vmem, size = 0x40000, scoped, tag = 'input window, operand 6']
    #allocation12 [shape = 'u8[8192]{0}', space=vmem, size = 0x2000, scoped, tag = 'output window, operand 0']
    %12 = vsyncpa [#allocation3], 0
    %s13 = scalar_lea.sflag [#allocation3], 1
    %14 = vsyncpa %s13, 0
    %15 = vsyncpa [#allocation6], 0
    %s16 = scalar_lea.sflag [#allocation6], 1
    %17 = vsyncpa %s16, 0
    %18 = vsyncpa [#allocation10], 0
    %s19 = scalar_lea.sflag [#allocation10], 1
    %20 = vsyncpa %s19, 0
    %21 = vsyncpa [#allocation4], 0
    %s22 = scalar_lea.sflag [#allocation4], 1
    %23 = vsyncpa %s22, 0
    loop: start=0, step=1, limit=6
    $region2: #{tpu_custom_call.1} parent=1 // loop_pre_header
      _
    $region3: #{tpu_custom_call.1} parent=1 // loop_header
      %s25 = sphi 0, %s29
      %p26 = scmp.ge.s32.totalorder %s25, 6
      %s32 = sphi 0, %s44
      %s33 = sphi 0, %s40
      %s34 = sphi 0, %s32
      %s35 = sphi 0, %s33
      %s36 = sphi 0, %s34
      %s37 = sphi 0, %s35
      %s49 = sphi 0, %s51
      %s52 = sphi 0, %s49
      %s53 = sphi 0, %s52
      %s69 = sphi 0, %s53
      %s77 = sphi 0, %s79
      %s80 = sphi 0, %s77
      %s81 = sphi 0, %s80
      %s97 = sphi 0, %s81
      %s105 = sphi 0, %s107
      %s108 = sphi 0, %s105
      %s109 = sphi 0, %s108
      %s125 = sphi 0, %s109
      %s133 = sphi 0, %s135
      %s136 = sphi 0, %s133
      %s137 = sphi 0, %s136
      %s153 = sphi 0, %s137
      %s161 = sphi 0, %s163
      %s164 = sphi 0, %s161
      %s165 = sphi 0, %s164
      %s181 = sphi 0, %s165
      %s189 = sphi 0, %s191
      %s192 = sphi 0, %s189
      %s193 = sphi 0, %s192
      %s209 = sphi 0, %s193
      %s215 = sphi 0, %s217
      %s218 = sphi 0, %s215
      %s219 = sphi 0, %s218
      %s235 = sphi 0, %s219
      %s243 = sphi 0, %s245
      %s246 = sphi 0, %s243
      %s247 = sphi 0, %s246
      %s263 = sphi 0, %s247
    $region4: #{tpu_custom_call.1} parent=1 // loop_header_branch
      %28 = sbr.rel (%p26) target = $region8
    $region5: #{tpu_custom_call.1} parent=1 // loop_body
      %s30 = ssub.s32 %s25, 1
      %s31 = ssub.s32 %s25, 2
      %s38 = sadd.s32 1, %s33
      %p39 = scmp.ge.s32.totalorder %s38, 2
      %s40 = scalar_select %p39, 0, %s38
      %s41 = sadd.s32 1, %s32
      %s42 = scalar_select %p39, %s41, %s32
      %p43 = scmp.ge.s32.totalorder %s42, 2
      %s44 = scalar_select %p43, 0, %s42
      %s45 = ssub.s32 %s33, %s40
      %s46 = ssub.s32 %s32, %s44
      %s47 = sor.u32 %s45, %s46
      %p48 = scmp.eq.s32.totalorder %s47, 0
      %s50 = sadd.s32 %s49, 1
      %s51 = scalar_select %p48, %s49, %s50
      %p54 = pneg %p48
      %p55 = scmp.eq.s32.totalorder %s25, 3
      %p56 = por %p54, %p55
      %p57 = scmp.ne.s32.totalorder %s49, %s52
      %p58 = scmp.eq.s32.totalorder %s25, 0
      %p59 = por %p57, %p58
      %p60 = scmp.ne.s32.totalorder %s49, %s52
      %p61 = scmp.eq.s32.totalorder %s30, 3
      %p62 = por %p60, %p61
      %p63 = scmp.ne.s32.totalorder %s52, %s53
      %p64 = scmp.eq.s32.totalorder %s30, 0
      %p65 = por %p63, %p64
      %p66 = scmp.ne.s32.totalorder %s52, %s53
      %p67 = scmp.eq.s32.totalorder %s31, 3
      %p68 = por %p66, %p67
      %p70 = scmp.ne.s32.totalorder %s53, %s69
      %p71 = scmp.eq.s32.totalorder %s31, 0
      %p72 = por %p70, %p71
      %s73 = ssub.s32 %s33, %s40
      %s74 = ssub.s32 %s32, %s44
      %s75 = sor.u32 %s73, %s74
      %p76 = scmp.eq.s32.totalorder %s75, 0
      %s78 = sadd.s32 %s77, 1
      %s79 = scalar_select %p76, %s77, %s78
      %p82 = pneg %p76
      %p83 = scmp.eq.s32.totalorder %s25, 3
      %p84 = por %p82, %p83
      %p85 = scmp.ne.s32.totalorder %s77, %s80
      %p86 = scmp.eq.s32.totalorder %s25, 0
      %p87 = por %p85, %p86
      %p88 = scmp.ne.s32.totalorder %s77, %s80
      %p89 = scmp.eq.s32.totalorder %s30, 3
      %p90 = por %p88, %p89
      %p91 = scmp.ne.s32.totalorder %s80, %s81
      %p92 = scmp.eq.s32.totalorder %s30, 0
      %p93 = por %p91, %p92
      %p94 = scmp.ne.s32.totalorder %s80, %s81
      %p95 = scmp.eq.s32.totalorder %s31, 3
      %p96 = por %p94, %p95
      %p98 = scmp.ne.s32.totalorder %s81, %s97
      %p99 = scmp.eq.s32.totalorder %s31, 0
      %p100 = por %p98, %p99
      %s101 = ssub.s32 %s33, %s40
      %s102 = ssub.s32 %s32, %s44
      %s103 = sor.u32 %s101, %s102
      %p104 = scmp.eq.s32.totalorder %s103, 0
      %s106 = sadd.s32 %s105, 1
      %s107 = scalar_select %p104, %s105, %s106
      %p110 = pneg %p104
      %p111 = scmp.eq.s32.totalorder %s25, 3
      %p112 = por %p110, %p111
      %p113 = scmp.ne.s32.totalorder %s105, %s108
      %p114 = scmp.eq.s32.totalorder %s25, 0
      %p115 = por %p113, %p114
      %p116 = scmp.ne.s32.totalorder %s105, %s108
      %p117 = scmp.eq.s32.totalorder %s30, 3
      %p118 = por %p116, %p117
      %p119 = scmp.ne.s32.totalorder %s108, %s109
      %p120 = scmp.eq.s32.totalorder %s30, 0
      %p121 = por %p119, %p120
      %p122 = scmp.ne.s32.totalorder %s108, %s109
      %p123 = scmp.eq.s32.totalorder %s31, 3
      %p124 = por %p122, %p123
      %p126 = scmp.ne.s32.totalorder %s109, %s125
      %p127 = scmp.eq.s32.totalorder %s31, 0
      %p128 = por %p126, %p127
      %s129 = ssub.s32 %s33, %s40
      %s130 = ssub.s32 %s32, %s44
      %s131 = sor.u32 %s129, %s130
      %p132 = scmp.eq.s32.totalorder %s131, 0
      %s134 = sadd.s32 %s133, 1
      %s135 = scalar_select %p132, %s133, %s134
      %p138 = pneg %p132
      %p139 = scmp.eq.s32.totalorder %s25, 3
      %p140 = por %p138, %p139
      %p141 = scmp.ne.s32.totalorder %s133, %s136
      %p142 = scmp.eq.s32.totalorder %s25, 0
      %p143 = por %p141, %p142
      %p144 = scmp.ne.s32.totalorder %s133, %s136
      %p145 = scmp.eq.s32.totalorder %s30, 3
      %p146 = por %p144, %p145
      %p147 = scmp.ne.s32.totalorder %s136, %s137
      %p148 = scmp.eq.s32.totalorder %s30, 0
      %p149 = por %p147, %p148
      %p150 = scmp.ne.s32.totalorder %s136, %s137
      %p151 = scmp.eq.s32.totalorder %s31, 3
      %p152 = por %p150, %p151
      %p154 = scmp.ne.s32.totalorder %s137, %s153
      %p155 = scmp.eq.s32.totalorder %s31, 0
      %p156 = por %p154, %p155
      %s157 = ssub.s32 %s33, %s40
      %s158 = ssub.s32 %s32, %s44
      %s159 = sor.u32 %s157, %s158
      %p160 = scmp.eq.s32.totalorder %s159, 0
      %s162 = sadd.s32 %s161, 1
      %s163 = scalar_select %p160, %s161, %s162
      %p166 = pneg %p160
      %p167 = scmp.eq.s32.totalorder %s25, 3
      %p168 = por %p166, %p167
      %p169 = scmp.ne.s32.totalorder %s161, %s164
      %p170 = scmp.eq.s32.totalorder %s25, 0
      %p171 = por %p169, %p170
      %p172 = scmp.ne.s32.totalorder %s161, %s164
      %p173 = scmp.eq.s32.totalorder %s30, 3
      %p174 = por %p172, %p173
      %p175 = scmp.ne.s32.totalorder %s164, %s165
      %p176 = scmp.eq.s32.totalorder %s30, 0
      %p177 = por %p175, %p176
      %p178 = scmp.ne.s32.totalorder %s164, %s165
      %p179 = scmp.eq.s32.totalorder %s31, 3
      %p180 = por %p178, %p179
      %p182 = scmp.ne.s32.totalorder %s165, %s181
      %p183 = scmp.eq.s32.totalorder %s31, 0
      %p184 = por %p182, %p183
      %s185 = ssub.s32 %s33, %s40
      %s186 = ssub.s32 %s32, %s44
      %s187 = sor.u32 %s185, %s186
      %p188 = scmp.eq.s32.totalorder %s187, 0
      %s190 = sadd.s32 %s189, 1
      %s191 = scalar_select %p188, %s189, %s190
      %p194 = pneg %p188
      %p195 = scmp.eq.s32.totalorder %s25, 3
      %p196 = por %p194, %p195
      %p197 = scmp.ne.s32.totalorder %s189, %s192
      %p198 = scmp.eq.s32.totalorder %s25, 0
      %p199 = por %p197, %p198
      %p200 = scmp.ne.s32.totalorder %s189, %s192
      %p201 = scmp.eq.s32.totalorder %s30, 3
      %p202 = por %p200, %p201
      %p203 = scmp.ne.s32.totalorder %s192, %s193
      %p204 = scmp.eq.s32.totalorder %s30, 0
      %p205 = por %p203, %p204
      %p206 = scmp.ne.s32.totalorder %s192, %s193
      %p207 = scmp.eq.s32.totalorder %s31, 3
      %p208 = por %p206, %p207
      %p210 = scmp.ne.s32.totalorder %s193, %s209
      %p211 = scmp.eq.s32.totalorder %s31, 0
      %p212 = por %p210, %p211
      %s213 = ssub.s32 %s32, %s44
      %p214 = scmp.eq.s32.totalorder %s213, 0
      %s216 = sadd.s32 %s215, 1
      %s217 = scalar_select %p214, %s215, %s216
      %p220 = pneg %p214
      %p221 = scmp.eq.s32.totalorder %s25, 3
      %p222 = por %p220, %p221
      %p223 = scmp.ne.s32.totalorder %s215, %s218
      %p224 = scmp.eq.s32.totalorder %s25, 0
      %p225 = por %p223, %p224
      %p226 = scmp.ne.s32.totalorder %s215, %s218
      %p227 = scmp.eq.s32.totalorder %s30, 3
      %p228 = por %p226, %p227
      %p229 = scmp.ne.s32.totalorder %s218, %s219
      %p230 = scmp.eq.s32.totalorder %s30, 0
      %p231 = por %p229, %p230
      %p232 = scmp.ne.s32.totalorder %s218, %s219
      %p233 = scmp.eq.s32.totalorder %s31, 3
      %p234 = por %p232, %p233
      %p236 = scmp.ne.s32.totalorder %s219, %s235
      %p237 = scmp.eq.s32.totalorder %s31, 0
      %p238 = por %p236, %p237
      %s239 = ssub.s32 %s32, %s44
      %s240 = ssub.s32 %s33, %s40
      %s241 = sor.u32 %s239, %s240
      %p242 = scmp.eq.s32.totalorder %s241, 0
      %s244 = sadd.s32 %s243, 1
      %s245 = scalar_select %p242, %s243, %s244
      %p248 = pneg %p242
      %p249 = scmp.eq.s32.totalorder %s25, 3
      %p250 = por %p248, %p249
      %p251 = scmp.ne.s32.totalorder %s243, %s246
      %p252 = scmp.eq.s32.totalorder %s25, 0
      %p253 = por %p251, %p252
      %p254 = scmp.ne.s32.totalorder %s243, %s246
      %p255 = scmp.eq.s32.totalorder %s30, 3
      %p256 = por %p254, %p255
      %p257 = scmp.ne.s32.totalorder %s246, %s247
      %p258 = scmp.eq.s32.totalorder %s30, 0
      %p259 = por %p257, %p258
      %p260 = scmp.ne.s32.totalorder %s246, %s247
      %p261 = scmp.eq.s32.totalorder %s31, 3
      %p262 = por %p260, %p261
      %p264 = scmp.ne.s32.totalorder %s247, %s263
      %p265 = scmp.eq.s32.totalorder %s31, 0
      %p266 = por %p264, %p265
      %p267 = scmp.le.s32.totalorder 1, %s25
      %p268 = scmp.lt.s32.totalorder %s25, 5
      %p269 = pnand %p267, %p268
      %p270 = pneg %p269
      // Predicated region
      $region9: #{tpu_custom_call.1} parent=5 // pred_check
        _
      $region10: #{tpu_custom_call.1} parent=5 // pred_check_branch
        %272 = sbr.rel (%p269) target = $region12
      $region11: #{tpu_custom_call.1} parent=5 // pred_region
        %s273 = ssub.s32 %s25, 1
      $region12: #{tpu_custom_call.1} parent=5 // pred_fallthru
        _
      %p274 = scmp.lt.s32.totalorder %s25, 4
      // Predicated region
      $region13: #{tpu_custom_call.1} parent=5 // pred_check
        %p275 = pneg %p274
      $region14: #{tpu_custom_call.1} parent=5 // pred_check_branch
        %277 = sbr.rel (%p275) target = $region16
      $region15: #{tpu_custom_call.1} parent=5 // pred_region
        // Predicated region
        $region17: #{tpu_custom_call.1} parent=15 // pred_check
          %p278 = pneg %p59
        $region18: #{tpu_custom_call.1} parent=15 // pred_check_branch
          %280 = sbr.rel (%p278) target = $region20
        $region19: #{tpu_custom_call.1} parent=15 // pred_region
          %s281 = sand.u32 %s49, 1
          %s282 = scalar_lea.sflag [#allocation3], %s281
          %s283 = sand.u32 %s49, 1
          %s284 = smul.addr %s283, 16
          %s285 = scalar_lea.vmem [#allocation2], %s284
          %s286 = smul.u32 4, %s32
          %288 = vsyncadd %s282, 0
          %s289 = smul.addr %s33, 8
          %s290 = sadd.s32 %s286, %s289
          %s291 = smul.addr %s290, 4
          %s292 = scalar_lea.hbm %s0, %s291
          %s293 = sshll.u32 %s292, 4
          %s294 = int_to_ptr.hbm [resolvable:$true] %s293
          %s295 = sshll.u32 %s285, 4
          %s296 = int_to_ptr.vmem [resolvable:$true] %s295
          %301 = dma.hbm_to_vmem [thread:$0]  %s294, 256, %s296, %s282, 64, 64, 4
        $region20: #{tpu_custom_call.1} parent=15 // pred_fallthru
          _
        // Predicated region
        $region21: #{tpu_custom_call.1} parent=15 // pred_check
          %p302 = pneg %p87
        $region22: #{tpu_custom_call.1} parent=15 // pred_check_branch
          %304 = sbr.rel (%p302) target = $region24
        $region23: #{tpu_custom_call.1} parent=15 // pred_region
          %s305 = sand.u32 %s25, 1
          %s306 = scalar_lea.sflag [#allocation6], %s305
          %s307 = sand.u32 %s77, 1
          %s308 = smul.addr %s307, 16
          %s309 = scalar_lea.vmem [#allocation5], %s308
          %s310 = smul.u32 4, %s32
          %312 = vsyncadd %s306, 0
          %s313 = smul.addr %s33, 8
          %s314 = sadd.s32 %s310, %s313
          %s315 = smul.addr %s314, 4
          %s316 = scalar_lea.hbm %s1, %s315
          %s317 = sshll.u32 %s316, 4
          %s318 = int_to_ptr.hbm [resolvable:$true] %s317
          %s319 = sshll.u32 %s309, 4
          %s320 = int_to_ptr.vmem [resolvable:$true] %s319
          %325 = dma.hbm_to_vmem [thread:$0]  %s318, 256, %s320, %s306, 64, 64, 4
        $region24: #{tpu_custom_call.1} parent=15 // pred_fallthru
          _
        // Predicated region
        $region25: #{tpu_custom_call.1} parent=15 // pred_check
          %p326 = pneg %p115
        $region26: #{tpu_custom_call.1} parent=15 // pred_check_branch
          %328 = sbr.rel (%p326) target = $region28
        $region27: #{tpu_custom_call.1} parent=15 // pred_region
          %s329 = sand.u32 %s25, 1
          %s330 = scalar_lea.sflag [#allocation6], %s329
          %s331 = sand.u32 %s105, 1
          %s332 = smul.addr %s331, 256
          %s333 = scalar_lea.vmem [#allocation7], %s332
          %s334 = smul.u32 16, %s32
          %336 = vsyncadd %s330, 0
          %s337 = smul.addr %s334, 4
          %s338 = smul.addr %s33, 128
          %s339 = sadd.s32 %s337, %s338
          %s340 = smul.addr %s339, 4
          %s341 = scalar_lea.hbm %s2, %s340
          %s342 = sshll.u32 %s341, 4
          %s343 = int_to_ptr.hbm [resolvable:$true] %s342
          %s344 = sshll.u32 %s333, 4
          %s345 = int_to_ptr.vmem [resolvable:$true] %s344
          %350 = dma.hbm_to_vmem [thread:$0]  %s343, 4096, %s345, %s330, 256, 256, 16
        $region28: #{tpu_custom_call.1} parent=15 // pred_fallthru
          _
        // Predicated region
        $region29: #{tpu_custom_call.1} parent=15 // pred_check
          %p351 = pneg %p143
        $region30: #{tpu_custom_call.1} parent=15 // pred_check_branch
          %353 = sbr.rel (%p351) target = $region32
        $region31: #{tpu_custom_call.1} parent=15 // pred_region
          %s354 = smul.u32 16, %s32
          %p355 = scmp.lt.s32.totalorder %s33, 1
          %s356 = scalar_select %p355, %s33, 1
          %p357 = scmp.lt.s32.totalorder %s354, 31
          %s358 = scalar_select %p357, %s354, 31
          %s359 = smul.addr %s356, 32
          %s360 = sadd.s32 %s358, %s359
          %s361 = smul.addr %s360, 8
          %s362 = scalar_lea.vmem %s3, %s361
          %s363 = smul.u32 16, %s32
        $region32: #{tpu_custom_call.1} parent=15 // pred_fallthru
          _
        // Predicated region
        $region33: #{tpu_custom_call.1} parent=15 // pred_check
          %p364 = pneg %p171
        $region34: #{tpu_custom_call.1} parent=15 // pred_check_branch
          %366 = sbr.rel (%p364) target = $region36
        $region35: #{tpu_custom_call.1} parent=15 // pred_region
          %s367 = sand.u32 %s161, 1
          %s368 = sand.u32 %s161, 1
          %s369 = smul.addr %s368, 128
          %s370 = scalar_lea.vmem [#allocation8], %s369
          %s371 = smul.addr %s33, 64
          %s372 = sadd.s32 %s32, %s371
          %s373 = smul.addr %s372, 4
          %s374 = scalar_lea.vmem %s4, %s373
          // Predicated region
          $region37: #{tpu_custom_call.1} parent=35 // pred_check
            _
          $region38: #{tpu_custom_call.1} parent=35 // pred_check_branch
            %376 = sbr.rel (0) target = $region40
          $region39: #{tpu_custom_call.1} parent=35 // pred_region
            // Predicated region
            $region41: #{tpu_custom_call.1} parent=39 // pred_check
              _
            $region42: #{tpu_custom_call.1} parent=39 // pred_check_branch
              %378 = sbr.rel target = $region44
            $region43: #{tpu_custom_call.1} parent=39 // pred_region
              // Predicated region
              $region56: #{tpu_custom_call.1} parent=43 // pred_check
                _
              $region57: #{tpu_custom_call.1} parent=43 // pred_check_branch
                %456 = sbr.rel (0) target = $region59
              $region58: #{tpu_custom_call.1} parent=43 // pred_region
                loop: start=0, step=1, limit=1
                $region60: #{tpu_custom_call.1} parent=58 // loop_pre_header
                  _
                $region61: #{tpu_custom_call.1} parent=58 // loop_header
                  %s458 = sphi 0, %s462
                  %p459 = scmp.ge.s32.totalorder %s458, 1
                  %s463 = sphi %s374, %s374
                  %s464 = sphi %s370, %s370
                $region62: #{tpu_custom_call.1} parent=58 // loop_header_branch
                  %461 = sbr.rel (%p459) target = $region66
                $region63: #{tpu_custom_call.1} parent=58 // loop_body
                  _
                $region64: #{tpu_custom_call.1} parent=58 // loop_footer
                  %s462 = sadd.s32 1, %s458
                $region65: #{tpu_custom_call.1} parent=58 // loop_footer_branch
                  %457 = sbr.rel target = $region61
                $region66: #{tpu_custom_call.1} parent=58 // loop_exit
                  _
                %s466 = ssub.s32 16, 1
                loop: start=0, step=1, limit=1
                $region67: #{tpu_custom_call.1} parent=58 // loop_pre_header
                  _
                $region68: #{tpu_custom_call.1} parent=58 // loop_header
                  %s468 = sphi 0, %s472
                  %p469 = scmp.ge.s32.totalorder %s468, 1
                  %s473 = sphi %s374, %s374
                  %s474 = sphi %s370, %s370
                $region69: #{tpu_custom_call.1} parent=58 // loop_header_branch
                  %471 = sbr.rel (%p469) target = $region73
                $region70: #{tpu_custom_call.1} parent=58 // loop_body
                  %v475 = vld [vmem:[%s473] sm:%s466]
                  %476 = vst [vmem:[%s474] sm:%s466] %v475
                  %v477 = vld [vmem:[%s473 + $0x8] sm:%s466]
                  %478 = vst [vmem:[%s474 + $0x4] sm:%s466] %v477
                  %v479 = vld [vmem:[%s473 + $0x10] sm:%s466]
                  %480 = vst [vmem:[%s474 + $0x8] sm:%s466] %v479
                  %v481 = vld [vmem:[%s473 + $0x18] sm:%s466]
                  %482 = vst [vmem:[%s474 + $0xc] sm:%s466] %v481
                  %v483 = vld [vmem:[%s473 + $0x20] sm:%s466]
                  %484 = vst [vmem:[%s474 + $0x10] sm:%s466] %v483
                  %v485 = vld [vmem:[%s473 + $0x28] sm:%s466]
                  %486 = vst [vmem:[%s474 + $0x14] sm:%s466] %v485
                  %v487 = vld [vmem:[%s473 + $0x30] sm:%s466]
                  %488 = vst [vmem:[%s474 + $0x18] sm:%s466] %v487
                  %v489 = vld [vmem:[%s473 + $0x38] sm:%s466]
                  %490 = vst [vmem:[%s474 + $0x1c] sm:%s466] %v489
                  %v491 = vld [vmem:[%s473 + $0x40] sm:%s466]
                  %492 = vst [vmem:[%s474 + $0x20] sm:%s466] %v491
                  %v493 = vld [vmem:[%s473 + $0x48] sm:%s466]
                  %494 = vst [vmem:[%s474 + $0x24] sm:%s466] %v493
                  %v495 = vld [vmem:[%s473 + $0x50] sm:%s466]
                  %496 = vst [vmem:[%s474 + $0x28] sm:%s466] %v495
                  %v497 = vld [vmem:[%s473 + $0x58] sm:%s466]
                  %498 = vst [vmem:[%s474 + $0x2c] sm:%s466] %v497
                  %v499 = vld [vmem:[%s473 + $0x60] sm:%s466]
                  %500 = vst [vmem:[%s474 + $0x30] sm:%s466] %v499
                  %v501 = vld [vmem:[%s473 + $0x68] sm:%s466]
                  %502 = vst [vmem:[%s474 + $0x34] sm:%s466] %v501
                  %v503 = vld [vmem:[%s473 + $0x70] sm:%s466]
                  %504 = vst [vmem:[%s474 + $0x38] sm:%s466] %v503
                  %v505 = vld [vmem:[%s473 + $0x78] sm:%s466]
                  %506 = vst [vmem:[%s474 + $0x3c] sm:%s466] %v505
                  %v507 = vld [vmem:[%s473 + $0x80] sm:%s466]
                  %508 = vst [vmem:[%s474 + $0x40] sm:%s466] %v507
                  %v509 = vld [vmem:[%s473 + $0x88] sm:%s466]
                  %510 = vst [vmem:[%s474 + $0x44] sm:%s466] %v509
                  %v511 = vld [vmem:[%s473 + $0x90] sm:%s466]
                  %512 = vst [vmem:[%s474 + $0x48] sm:%s466] %v511
                  %v513 = vld [vmem:[%s473 + $0x98] sm:%s466]
                  %514 = vst [vmem:[%s474 + $0x4c] sm:%s466] %v513
                  %v515 = vld [vmem:[%s473 + $0xa0] sm:%s466]
                  %516 = vst [vmem:[%s474 + $0x50] sm:%s466] %v515
                  %v517 = vld [vmem:[%s473 + $0xa8] sm:%s466]
                  %518 = vst [vmem:[%s474 + $0x54] sm:%s466] %v517
                  %v519 = vld [vmem:[%s473 + $0xb0] sm:%s466]
                  %520 = vst [vmem:[%s474 + $0x58] sm:%s466] %v519
                  %v521 = vld [vmem:[%s473 + $0xb8] sm:%s466]
                  %522 = vst [vmem:[%s474 + $0x5c] sm:%s466] %v521
                  %v523 = vld [vmem:[%s473 + $0xc0] sm:%s466]
                  %524 = vst [vmem:[%s474 + $0x60] sm:%s466] %v523
                  %v525 = vld [vmem:[%s473 + $0xc8] sm:%s466]
                  %526 = vst [vmem:[%s474 + $0x64] sm:%s466] %v525
                  %v527 = vld [vmem:[%s473 + $0xd0] sm:%s466]
                  %528 = vst [vmem:[%s474 + $0x68] sm:%s466] %v527
                  %v529 = vld [vmem:[%s473 + $0xd8] sm:%s466]
                  %530 = vst [vmem:[%s474 + $0x6c] sm:%s466] %v529
                  %v531 = vld [vmem:[%s473 + $0xe0] sm:%s466]
                  %532 = vst [vmem:[%s474 + $0x70] sm:%s466] %v531
                  %v533 = vld [vmem:[%s473 + $0xe8] sm:%s466]
                  %534 = vst [vmem:[%s474 + $0x74] sm:%s466] %v533
                  %v535 = vld [vmem:[%s473 + $0xf0] sm:%s466]
                  %536 = vst [vmem:[%s474 + $0x78] sm:%s466] %v535
                  %v537 = vld [vmem:[%s473 + $0xf8] sm:%s466]
                  %538 = vst [vmem:[%s474 + $0x7c] sm:%s466] %v537
                $region71: #{tpu_custom_call.1} parent=58 // loop_footer
                  %s472 = sadd.s32 1, %s468
                $region72: #{tpu_custom_call.1} parent=58 // loop_footer_branch
                  %467 = sbr.rel target = $region68
                $region73: #{tpu_custom_call.1} parent=58 // loop_exit
                  _
              $region59: #{tpu_custom_call.1} parent=43 // pred_fallthru
                _
            $region44: #{tpu_custom_call.1} parent=39 // pred_fallthru
              _
            // Predicated region
            $region45: #{tpu_custom_call.1} parent=39 // pred_check
              _
            $region46: #{tpu_custom_call.1} parent=39 // pred_check_branch
              %380 = sbr.rel (0) target = $region48
            $region47: #{tpu_custom_call.1} parent=39 // pred_region
              %s382 = ssub.s32 16, 1
              loop: start=0, step=1, limit=1
              $region49: #{tpu_custom_call.1} parent=47 // loop_pre_header
                _
              $region50: #{tpu_custom_call.1} parent=47 // loop_header
                %s384 = sphi 0, %s388
                %p385 = scmp.ge.s32.totalorder %s384, 1
                %s389 = sphi %s374, %s374
                %s390 = sphi %s370, %s370
              $region51: #{tpu_custom_call.1} parent=47 // loop_header_branch
                %387 = sbr.rel (%p385) target = $region55
              $region52: #{tpu_custom_call.1} parent=47 // loop_body
                %v391 = vld [vmem:[%s389] sm:%s382]
                %392 = vst [vmem:[%s390] sm:%s382] %v391
                %v393 = vld [vmem:[%s389 + $0x8] sm:%s382]
                %394 = vst [vmem:[%s390 + $0x4] sm:%s382] %v393
                %v395 = vld [vmem:[%s389 + $0x10] sm:%s382]
                %396 = vst [vmem:[%s390 + $0x8] sm:%s382] %v395
                %v397 = vld [vmem:[%s389 + $0x18] sm:%s382]
                %398 = vst [vmem:[%s390 + $0xc] sm:%s382] %v397
                %v399 = vld [vmem:[%s389 + $0x20] sm:%s382]
                %400 = vst [vmem:[%s390 + $0x10] sm:%s382] %v399
                %v401 = vld [vmem:[%s389 + $0x28] sm:%s382]
                %402 = vst [vmem:[%s390 + $0x14] sm:%s382] %v401
                %v403 = vld [vmem:[%s389 + $0x30] sm:%s382]
                %404 = vst [vmem:[%s390 + $0x18] sm:%s382] %v403
                %v405 = vld [vmem:[%s389 + $0x38] sm:%s382]
                %406 = vst [vmem:[%s390 + $0x1c] sm:%s382] %v405
                %v407 = vld [vmem:[%s389 + $0x40] sm:%s382]
                %408 = vst [vmem:[%s390 + $0x20] sm:%s382] %v407
                %v409 = vld [vmem:[%s389 + $0x48] sm:%s382]
                %410 = vst [vmem:[%s390 + $0x24] sm:%s382] %v409
                %v411 = vld [vmem:[%s389 + $0x50] sm:%s382]
                %412 = vst [vmem:[%s390 + $0x28] sm:%s382] %v411
                %v413 = vld [vmem:[%s389 + $0x58] sm:%s382]
                %414 = vst [vmem:[%s390 + $0x2c] sm:%s382] %v413
                %v415 = vld [vmem:[%s389 + $0x60] sm:%s382]
                %416 = vst [vmem:[%s390 + $0x30] sm:%s382] %v415
                %v417 = vld [vmem:[%s389 + $0x68] sm:%s382]
                %418 = vst [vmem:[%s390 + $0x34] sm:%s382] %v417
                %v419 = vld [vmem:[%s389 + $0x70] sm:%s382]
                %420 = vst [vmem:[%s390 + $0x38] sm:%s382] %v419
                %v421 = vld [vmem:[%s389 + $0x78] sm:%s382]
                %422 = vst [vmem:[%s390 + $0x3c] sm:%s382] %v421
                %v423 = vld [vmem:[%s389 + $0x80] sm:%s382]
                %424 = vst [vmem:[%s390 + $0x40] sm:%s382] %v423
                %v425 = vld [vmem:[%s389 + $0x88] sm:%s382]
                %426 = vst [vmem:[%s390 + $0x44] sm:%s382] %v425
                %v427 = vld [vmem:[%s389 + $0x90] sm:%s382]
                %428 = vst [vmem:[%s390 + $0x48] sm:%s382] %v427
                %v429 = vld [vmem:[%s389 + $0x98] sm:%s382]
                %430 = vst [vmem:[%s390 + $0x4c] sm:%s382] %v429
                %v431 = vld [vmem:[%s389 + $0xa0] sm:%s382]
                %432 = vst [vmem:[%s390 + $0x50] sm:%s382] %v431
                %v433 = vld [vmem:[%s389 + $0xa8] sm:%s382]
                %434 = vst [vmem:[%s390 + $0x54] sm:%s382] %v433
                %v435 = vld [vmem:[%s389 + $0xb0] sm:%s382]
                %436 = vst [vmem:[%s390 + $0x58] sm:%s382] %v435
                %v437 = vld [vmem:[%s389 + $0xb8] sm:%s382]
                %438 = vst [vmem:[%s390 + $0x5c] sm:%s382] %v437
                %v439 = vld [vmem:[%s389 + $0xc0] sm:%s382]
                %440 = vst [vmem:[%s390 + $0x60] sm:%s382] %v439
                %v441 = vld [vmem:[%s389 + $0xc8] sm:%s382]
                %442 = vst [vmem:[%s390 + $0x64] sm:%s382] %v441
                %v443 = vld [vmem:[%s389 + $0xd0] sm:%s382]
                %444 = vst [vmem:[%s390 + $0x68] sm:%s382] %v443
                %v445 = vld [vmem:[%s389 + $0xd8] sm:%s382]
                %446 = vst [vmem:[%s390 + $0x6c] sm:%s382] %v445
                %v447 = vld [vmem:[%s389 + $0xe0] sm:%s382]
                %448 = vst [vmem:[%s390 + $0x70] sm:%s382] %v447
                %v449 = vld [vmem:[%s389 + $0xe8] sm:%s382]
                %450 = vst [vmem:[%s390 + $0x74] sm:%s382] %v449
                %v451 = vld [vmem:[%s389 + $0xf0] sm:%s382]
                %452 = vst [vmem:[%s390 + $0x78] sm:%s382] %v451
                %v453 = vld [vmem:[%s389 + $0xf8] sm:%s382]
                %454 = vst [vmem:[%s390 + $0x7c] sm:%s382] %v453
              $region53: #{tpu_custom_call.1} parent=47 // loop_footer
                %s388 = sadd.s32 1, %s384
              $region54: #{tpu_custom_call.1} parent=47 // loop_footer_branch
                %383 = sbr.rel target = $region50
              $region55: #{tpu_custom_call.1} parent=47 // loop_exit
                _
            $region48: #{tpu_custom_call.1} parent=39 // pred_fallthru
              _
          $region40: #{tpu_custom_call.1} parent=35 // pred_fallthru
            _
          %539 = vnop
        $region36: #{tpu_custom_call.1} parent=15 // pred_fallthru
          _
        // Predicated region
        $region74: #{tpu_custom_call.1} parent=15 // pred_check
          %p540 = pneg %p199
        $region75: #{tpu_custom_call.1} parent=15 // pred_check_branch
          %542 = sbr.rel (%p540) target = $region77
        $region76: #{tpu_custom_call.1} parent=15 // pred_region
          %s543 = sand.u32 %s25, 1
          %s544 = scalar_lea.sflag [#allocation10], %s543
          %s545 = sand.u32 %s189, 1
          %s546 = smul.addr %s545, 128
          %s547 = scalar_lea.vmem [#allocation9], %s546
          %s548 = smul.u32 16, %s32
          %550 = vsyncadd %s544, 0
          %s551 = smul.addr %s548, 2
          %s552 = smul.addr %s33, 64
          %s553 = sadd.s32 %s551, %s552
          %s554 = smul.addr %s553, 4
          %s555 = scalar_lea.hbm %s5, %s554
          %s556 = sshll.u32 %s555, 4
          %s557 = int_to_ptr.hbm [resolvable:$true] %s556
          %s558 = sshll.u32 %s547, 4
          %s559 = int_to_ptr.vmem [resolvable:$true] %s558
          %564 = dma.hbm_to_vmem [thread:$0]  %s557, 2048, %s559, %s544, 128, 128, 8
        $region77: #{tpu_custom_call.1} parent=15 // pred_fallthru
          _
        // Predicated region
        $region78: #{tpu_custom_call.1} parent=15 // pred_check
          %p565 = pneg %p225
        $region79: #{tpu_custom_call.1} parent=15 // pred_check_branch
          %567 = sbr.rel (%p565) target = $region81
        $region80: #{tpu_custom_call.1} parent=15 // pred_region
          %s568 = sand.u32 %s25, 1
          %s569 = scalar_lea.sflag [#allocation10], %s568
          %s570 = sand.u32 %s215, 1
          %s571 = smul.addr %s570, 256
          %s572 = scalar_lea.vmem [#allocation11], %s571
          %s573 = smul.u32 16, %s32
          %575 = vsyncadd %s569, 0
          %s576 = smul.addr %s573, 2
          %s577 = smul.addr %s576, 8
          %s578 = scalar_lea.hbm %s6, %s577
          %s579 = sshll.u32 %s578, 4
          %s580 = int_to_ptr.hbm [resolvable:$true] %s579
          %s581 = sshll.u32 %s572, 4
          %s582 = int_to_ptr.vmem [resolvable:$true] %s581
          %587 = dma.hbm_to_vmem [thread:$0]  %s580, 4096, %s582, %s569, 256, 256, 16
        $region81: #{tpu_custom_call.1} parent=15 // pred_fallthru
          _
      $region16: #{tpu_custom_call.1} parent=5 // pred_fallthru
        _
      %p588 = scmp.le.s32.totalorder 1, %s25
      %p589 = scmp.lt.s32.totalorder %s25, 5
      %p590 = pnand %p588, %p589
      %p591 = pneg %p590
      // Predicated region
      $region82: #{tpu_custom_call.1} parent=5 // pred_check
        _
      $region83: #{tpu_custom_call.1} parent=5 // pred_check_branch
        %593 = sbr.rel (%p590) target = $region85
      $region84: #{tpu_custom_call.1} parent=5 // pred_region
        %s594 = ssub.s32 %s25, 1
        %s595 = sand.u32 %s52, 1
        %s596 = scalar_lea.sflag [#allocation3], %s595
        %s597 = sand.u32 %s52, 1
        %s598 = smul.addr %s597, 16
        %s599 = scalar_lea.vmem [#allocation2], %s598
        // Predicated region
        $region86: #{tpu_custom_call.1} parent=84 // pred_check
          %p600 = pneg %p65
        $region87: #{tpu_custom_call.1} parent=84 // pred_check_branch
          %602 = sbr.rel (%p600) target = $region89
        $region88: #{tpu_custom_call.1} parent=84 // pred_region
          %604 = dma.done %s596, 256
        $region89: #{tpu_custom_call.1} parent=84 // pred_fallthru
          _
        %s605 = sand.u32 %s30, 1
        %s606 = scalar_lea.sflag [#allocation6], %s605
        %s607 = sand.u32 %s80, 1
        %s608 = smul.addr %s607, 16
        %s609 = scalar_lea.vmem [#allocation5], %s608
        // Predicated region
        $region90: #{tpu_custom_call.1} parent=84 // pred_check
          %p610 = pneg %p93
        $region91: #{tpu_custom_call.1} parent=84 // pred_check_branch
          %612 = sbr.rel (%p610) target = $region93
        $region92: #{tpu_custom_call.1} parent=84 // pred_region
          %614 = dma.done %s606, 256
        $region93: #{tpu_custom_call.1} parent=84 // pred_fallthru
          _
        %s615 = sand.u32 %s30, 1
        %s616 = scalar_lea.sflag [#allocation6], %s615
        %s617 = sand.u32 %s108, 1
        %s618 = smul.addr %s617, 256
        %s619 = scalar_lea.vmem [#allocation7], %s618
        // Predicated region
        $region94: #{tpu_custom_call.1} parent=84 // pred_check
          %p620 = pneg %p121
        $region95: #{tpu_custom_call.1} parent=84 // pred_check_branch
          %622 = sbr.rel (%p620) target = $region97
        $region96: #{tpu_custom_call.1} parent=84 // pred_region
          %624 = dma.done %s616, 4096
        $region97: #{tpu_custom_call.1} parent=84 // pred_fallthru
          _
        %s625 = sand.u32 %s164, 1
        %s626 = sand.u32 %s164, 1
        %s627 = smul.addr %s626, 128
        %s628 = scalar_lea.vmem [#allocation8], %s627
        // Predicated region
        $region98: #{tpu_custom_call.1} parent=84 // pred_check
          %p629 = pneg %p177
        $region99: #{tpu_custom_call.1} parent=84 // pred_check_branch
          %631 = sbr.rel (%p629) target = $region101
        $region100: #{tpu_custom_call.1} parent=84 // pred_region
          _
        $region101: #{tpu_custom_call.1} parent=84 // pred_fallthru
          _
        %s632 = sand.u32 %s30, 1
        %s633 = scalar_lea.sflag [#allocation10], %s632
        %s634 = sand.u32 %s192, 1
        %s635 = smul.addr %s634, 128
        %s636 = scalar_lea.vmem [#allocation9], %s635
        // Predicated region
        $region102: #{tpu_custom_call.1} parent=84 // pred_check
          %p637 = pneg %p205
        $region103: #{tpu_custom_call.1} parent=84 // pred_check_branch
          %639 = sbr.rel (%p637) target = $region105
        $region104: #{tpu_custom_call.1} parent=84 // pred_region
          %641 = dma.done %s633, 2048
        $region105: #{tpu_custom_call.1} parent=84 // pred_fallthru
          _
        %s642 = sand.u32 %s30, 1
        %s643 = scalar_lea.sflag [#allocation10], %s642
        %s644 = sand.u32 %s218, 1
        %s645 = smul.addr %s644, 256
        %s646 = scalar_lea.vmem [#allocation11], %s645
        // Predicated region
        $region106: #{tpu_custom_call.1} parent=84 // pred_check
          %p647 = pneg %p231
        $region107: #{tpu_custom_call.1} parent=84 // pred_check_branch
          %649 = sbr.rel (%p647) target = $region109
        $region108: #{tpu_custom_call.1} parent=84 // pred_region
          %651 = dma.done %s643, 4096
        $region109: #{tpu_custom_call.1} parent=84 // pred_fallthru
          _
        %s652 = sand.u32 %s52, 1
        %s653 = scalar_lea.sflag [#allocation3], %s652
        %s654 = sand.u32 %s52, 1
        %s655 = smul.addr %s654, 16
        %s656 = scalar_lea.vmem [#allocation2], %s655
        %p657 = pneg %p65
        %p658 = pneg %p62
        %s659 = sand.u32 %s30, 1
        %s660 = scalar_lea.sflag [#allocation6], %s659
        %s661 = sand.u32 %s80, 1
        %s662 = smul.addr %s661, 16
        %s663 = scalar_lea.vmem [#allocation5], %s662
        %p664 = pneg %p93
        %p665 = pneg %p90
        %s666 = sand.u32 %s30, 1
        %s667 = scalar_lea.sflag [#allocation6], %s666
        %s668 = sand.u32 %s108, 1
        %s669 = smul.addr %s668, 256
        %s670 = scalar_lea.vmem [#allocation7], %s669
        %p671 = pneg %p121
        %p672 = pneg %p118
        %s673 = smul.u32 16, %s34
        %p674 = scmp.lt.s32.totalorder %s35, 1
        %s675 = scalar_select %p674, %s35, 1
        %p676 = scmp.lt.s32.totalorder %s673, 31
        %s677 = scalar_select %p676, %s673, 31
        %s678 = smul.addr %s675, 32
        %s679 = sadd.s32 %s677, %s678
        %s680 = smul.addr %s679, 8
        %s681 = scalar_lea.vmem %s3, %s680
        %p682 = pneg %p149
        %p683 = pneg %p146
        %s684 = sand.u32 %s164, 1
        %s685 = sand.u32 %s164, 1
        %s686 = smul.addr %s685, 128
        %s687 = scalar_lea.vmem [#allocation8], %s686
        %p688 = pneg %p177
        %p689 = pneg %p174
        %s690 = sand.u32 %s30, 1
        %s691 = scalar_lea.sflag [#allocation10], %s690
        %s692 = sand.u32 %s192, 1
        %s693 = smul.addr %s692, 128
        %s694 = scalar_lea.vmem [#allocation9], %s693
        %p695 = pneg %p205
        %p696 = pneg %p202
        %s697 = sand.u32 %s30, 1
        %s698 = scalar_lea.sflag [#allocation10], %s697
        %s699 = sand.u32 %s218, 1
        %s700 = smul.addr %s699, 256
        %s701 = scalar_lea.vmem [#allocation11], %s700
        %p702 = pneg %p231
        %p703 = pneg %p228
        %p704 = pneg %p259
        %p705 = pneg %p256
        %s706 = sand.u32 %s246, 1
        %s707 = scalar_lea.sflag [#allocation4], %s706
        %s708 = sand.u32 %s246, 1
        %s709 = smul.addr %s708, 8
        %s710 = scalar_lea.vmem [#allocation12], %s709
        %s711 = smul.u32 4, %s34
        %s712 = smul.u32 4, %s34
        %s713 = smul.u32 16, %s34
        %s714 = smul.u32 16, %s34
        %p715 = scmp.lt.s32.totalorder %s35, 1
        %s716 = scalar_select %p715, %s35, 1
        %p717 = scmp.lt.s32.totalorder %s714, 31
        %s718 = scalar_select %p717, %s714, 31
        %s719 = smul.addr %s716, 32
        %s720 = sadd.s32 %s718, %s719
        %s721 = smul.addr %s720, 8
        %s722 = scalar_lea.vmem %s3, %s721
        %s723 = smul.u32 16, %s34
        %s724 = smul.u32 16, %s34
        %s725 = smul.u32 16, %s34
        %v726 = vld [vmem:[%s599] sm:$0xf]
        %v727 = vld [vmem:[%s599 + $0x4] sm:$0xf]
        %v728 = vld [vmem:[%s599 + $0x8] sm:$0xf]
        %v729 = vld [vmem:[%s599 + $0xc] sm:$0xf]
        %v730 = vunpack.c.l.bf16 %v726
        %v731 = vunpack.c.l.bf16 %v727
        %v732 = vunpack.c.l.bf16 %v728
        %v733 = vunpack.c.l.bf16 %v729
        %v734 = vld [vmem:[%s609] sm:$0xf]
        %v735 = vld [vmem:[%s609 + $0x4] sm:$0xf]
        %v736 = vld [vmem:[%s609 + $0x8] sm:$0xf]
        %v737 = vld [vmem:[%s609 + $0xc] sm:$0xf]
        %v738 = vunpack.c.l.bf16 %v734
        %v739 = vunpack.c.l.bf16 %v735
        %v740 = vunpack.c.l.bf16 %v736
        %v741 = vunpack.c.l.bf16 %v737
        %v742 = vsub.f32 %v730, %v738
        %v743 = vsub.f32 %v731, %v739
        %v744 = vsub.f32 %v732, %v740
        %v745 = vsub.f32 %v733, %v741
        %v746 = vmul.f32 %v742, %v742
        %v747 = vmul.f32 %v743, %v743
        %v748 = vmul.f32 %v744, %v744
        %v749 = vmul.f32 %v745, %v745
        %v750 = vadd.f32 %v746, %v747
        %v751 = vadd.f32 %v750, %v748
        %v752 = vadd.f32 %v751, %v749
        %753 = vadd.xlane.f32.xlu0 %v752
        %v754 = vpop.xlane.xlu0 %753
        %v755 = vrot.slane %v754, 4
        %v756 = vadd.f32 %v754, %v755
        %v757 = vrot.slane %v756, 2
        %v758 = vadd.f32 %v756, %v757
        %v759 = vrot.slane %v758, 1
        %v760 = vadd.f32 %v758, %v759
        %s761 = vtos %v760
        %v762 = vld [vmem:[%s722] sm:$0xff]
        %v763 = vld [vmem:[%s722 + $0x8] sm:$0xff]
        %v764 = vld [vmem:[%s722 + $0x10] sm:$0xff]
        %v765 = vld [vmem:[%s722 + $0x18] sm:$0xff]
        %v766 = vld [vmem:[%s722 + $0x20] sm:$0xff]
        %v767 = vld [vmem:[%s722 + $0x28] sm:$0xff]
        %v768 = vld [vmem:[%s722 + $0x30] sm:$0xff]
        %v769 = vld [vmem:[%s722 + $0x38] sm:$0xff]
        %v770 = vld [vmem:[%s722 + $0x40] sm:$0xff]
        %v771 = vld [vmem:[%s722 + $0x48] sm:$0xff]
        %v772 = vld [vmem:[%s722 + $0x50] sm:$0xff]
        %v773 = vld [vmem:[%s722 + $0x58] sm:$0xff]
        %v774 = vld [vmem:[%s722 + $0x60] sm:$0xff]
        %v775 = vld [vmem:[%s722 + $0x68] sm:$0xff]
        %v776 = vld [vmem:[%s722 + $0x70] sm:$0xff]
        %v777 = vld [vmem:[%s722 + $0x78] sm:$0xff]
        loop: start=0, step=1, limit=2
        $region110: #{tpu_custom_call.1} parent=84 // loop_pre_header
          _
        $region111: #{tpu_custom_call.1} parent=84 // loop_header
          %s779 = sphi 0, %s783
          %p780 = scmp.ge.s32.totalorder %s779, 2
          %v784 = vphi -inf, %v1115
          %v785 = vphi -inf, %v1116
          %v786 = vphi -inf, %v1117
          %v787 = vphi -inf, %v1118
          %v788 = vphi -inf, %v1119
          %v789 = vphi -inf, %v1120
          %v790 = vphi -inf, %v1121
          %v791 = vphi -inf, %v1122
          %v792 = vphi -inf, %v1123
          %v793 = vphi -inf, %v1124
          %v794 = vphi -inf, %v1125
          %v795 = vphi -inf, %v1126
          %v796 = vphi -inf, %v1127
          %v797 = vphi -inf, %v1128
          %v798 = vphi -inf, %v1129
          %v799 = vphi -inf, %v1130
          %v800 = vphi 0.0, %v1339
          %v801 = vphi 0.0, %v1340
          %v802 = vphi 0.0, %v1341
          %v803 = vphi 0.0, %v1342
          %v804 = vphi 0.0, %v1343
          %v805 = vphi 0.0, %v1344
          %v806 = vphi 0.0, %v1345
          %v807 = vphi 0.0, %v1346
          %v808 = vphi 0.0, %v1347
          %v809 = vphi 0.0, %v1348
          %v810 = vphi 0.0, %v1349
          %v811 = vphi 0.0, %v1350
          %v812 = vphi 0.0, %v1351
          %v813 = vphi 0.0, %v1352
          %v814 = vphi 0.0, %v1353
          %v815 = vphi 0.0, %v1354
          %v816 = vphi 0.0, %v1051
          %v817 = vphi 0.0, %v1052
          %v818 = vphi 0.0, %v1053
          %v819 = vphi 0.0, %v1054
          %v820 = vphi 0.0, %v1055
          %v821 = vphi 0.0, %v1056
          %v822 = vphi 0.0, %v1057
          %v823 = vphi 0.0, %v1058
          %v824 = vphi 0.0, %v1059
          %v825 = vphi 0.0, %v1060
          %v826 = vphi 0.0, %v1061
          %v827 = vphi 0.0, %v1062
          %v828 = vphi 0.0, %v1063
          %v829 = vphi 0.0, %v1064
          %v830 = vphi 0.0, %v1065
          %v831 = vphi 0.0, %v1066
        $region112: #{tpu_custom_call.1} parent=84 // loop_header_branch
          %782 = sbr.rel (%p780) target = $region116
        $region113: #{tpu_custom_call.1} parent=84 // loop_body
          %s832 = smul.u32 %s779, 256
          %s833 = sshra.s32 %s832, 7
          %s834 = sand.u32 %s832, 127
          %s835 = smul.addr %s833, 4
          %s836 = scalar_lea.vmem %s619, %s835 [#allocation7]
          %v837 = vld [vmem:[%s836] sm:$0xff]
          %v838 = vld [vmem:[%s836 + $0x10] sm:$0xff]
          %v839 = vld [vmem:[%s836 + $0x20] sm:$0xff]
          %v840 = vld [vmem:[%s836 + $0x30] sm:$0xff]
          %v841 = vld [vmem:[%s836 + $0x40] sm:$0xff]
          %v842 = vld [vmem:[%s836 + $0x50] sm:$0xff]
          %v843 = vld [vmem:[%s836 + $0x60] sm:$0xff]
          %v844 = vld [vmem:[%s836 + $0x70] sm:$0xff]
          %v845 = vld [vmem:[%s836 + $0x80] sm:$0xff]
          %v846 = vld [vmem:[%s836 + $0x90] sm:$0xff]
          %v847 = vld [vmem:[%s836 + $0xa0] sm:$0xff]
          %v848 = vld [vmem:[%s836 + $0xb0] sm:$0xff]
          %v849 = vld [vmem:[%s836 + $0xc0] sm:$0xff]
          %v850 = vld [vmem:[%s836 + $0xd0] sm:$0xff]
          %v851 = vld [vmem:[%s836 + $0xe0] sm:$0xff]
          %v852 = vld [vmem:[%s836 + $0xf0] sm:$0xff]
          %v853 = vunpack.c.l.bf16 %v837
          %v854 = vunpack.c.h.bf16 %v837
          %v855 = vunpack.c.l.bf16 %v838
          %v856 = vunpack.c.h.bf16 %v838
          %v857 = vunpack.c.l.bf16 %v839
          %v858 = vunpack.c.h.bf16 %v839
          %v859 = vunpack.c.l.bf16 %v840
          %v860 = vunpack.c.h.bf16 %v840
          %v861 = vunpack.c.l.bf16 %v841
          %v862 = vunpack.c.h.bf16 %v841
          %v863 = vunpack.c.l.bf16 %v842
          %v864 = vunpack.c.h.bf16 %v842
          %v865 = vunpack.c.l.bf16 %v843
          %v866 = vunpack.c.h.bf16 %v843
          %v867 = vunpack.c.l.bf16 %v844
          %v868 = vunpack.c.h.bf16 %v844
          %v869 = vunpack.c.l.bf16 %v845
          %v870 = vunpack.c.h.bf16 %v845
          %v871 = vunpack.c.l.bf16 %v846
          %v872 = vunpack.c.h.bf16 %v846
          %v873 = vunpack.c.l.bf16 %v847
          %v874 = vunpack.c.h.bf16 %v847
          %v875 = vunpack.c.l.bf16 %v848
          %v876 = vunpack.c.h.bf16 %v848
          %v877 = vunpack.c.l.bf16 %v849
          %v878 = vunpack.c.h.bf16 %v849
          %v879 = vunpack.c.l.bf16 %v850
          %v880 = vunpack.c.h.bf16 %v850
          %v881 = vunpack.c.l.bf16 %v851
          %v882 = vunpack.c.h.bf16 %v851
          %v883 = vunpack.c.l.bf16 %v852
          %v884 = vunpack.c.h.bf16 %v852
          %v885 = vlaneseq
          %v886 = vand.u32 %v885, 127
          %v887 = vadd.s32 %v886, 128
          %v888 = vstv %s832
          %v889 = vadd.s32 %v886, %v888
          %v890 = vadd.s32 %v887, %v888
          %891 = vset.pattern.permute.xlu0 0
          %892 = vperm.xlu0 %891, %v762
          %v893 = vpop.permute.xlu0 %892
          %894 = vset.pattern.permute.xlu0 0
          %895 = vperm.xlu0 %894, %v763
          %v896 = vpop.permute.xlu0 %895
          %897 = vset.pattern.permute.xlu0 0
          %898 = vperm.xlu0 %897, %v764
          %v899 = vpop.permute.xlu0 %898
          %900 = vset.pattern.permute.xlu0 0
          %901 = vperm.xlu0 %900, %v765
          %v902 = vpop.permute.xlu0 %901
          %903 = vset.pattern.permute.xlu0 0
          %904 = vperm.xlu0 %903, %v766
          %v905 = vpop.permute.xlu0 %904
          %906 = vset.pattern.permute.xlu0 0
          %907 = vperm.xlu0 %906, %v767
          %v908 = vpop.permute.xlu0 %907
          %909 = vset.pattern.permute.xlu0 0
          %910 = vperm.xlu0 %909, %v768
          %v911 = vpop.permute.xlu0 %910
          %912 = vset.pattern.permute.xlu0 0
          %913 = vperm.xlu0 %912, %v769
          %v914 = vpop.permute.xlu0 %913
          %915 = vset.pattern.permute.xlu0 0
          %916 = vperm.xlu0 %915, %v770
          %v917 = vpop.permute.xlu0 %916
          %918 = vset.pattern.permute.xlu0 0
          %919 = vperm.xlu0 %918, %v771
          %v920 = vpop.permute.xlu0 %919
          %921 = vset.pattern.permute.xlu0 0
          %922 = vperm.xlu0 %921, %v772
          %v923 = vpop.permute.xlu0 %922
          %924 = vset.pattern.permute.xlu0 0
          %925 = vperm.xlu0 %924, %v773
          %v926 = vpop.permute.xlu0 %925
          %927 = vset.pattern.permute.xlu0 0
          %928 = vperm.xlu0 %927, %v774
          %v929 = vpop.permute.xlu0 %928
          %930 = vset.pattern.permute.xlu0 0
          %931 = vperm.xlu0 %930, %v775
          %v932 = vpop.permute.xlu0 %931
          %933 = vset.pattern.permute.xlu0 0
          %934 = vperm.xlu0 %933, %v776
          %v935 = vpop.permute.xlu0 %934
          %936 = vset.pattern.permute.xlu0 0
          %937 = vperm.xlu0 %936, %v777
          %v938 = vpop.permute.xlu0 %937
          %vm939 = vcmp.eq.s32.totalorder %v889, %v893
          %vm940 = vcmp.eq.s32.totalorder %v890, %v893
          %vm941 = vcmp.eq.s32.totalorder %v889, %v896
          %vm942 = vcmp.eq.s32.totalorder %v890, %v896
          %vm943 = vcmp.eq.s32.totalorder %v889, %v899
          %vm944 = vcmp.eq.s32.totalorder %v890, %v899
          %vm945 = vcmp.eq.s32.totalorder %v889, %v902
          %vm946 = vcmp.eq.s32.totalorder %v890, %v902
          %vm947 = vcmp.eq.s32.totalorder %v889, %v905
          %vm948 = vcmp.eq.s32.totalorder %v890, %v905
          %vm949 = vcmp.eq.s32.totalorder %v889, %v908
          %vm950 = vcmp.eq.s32.totalorder %v890, %v908
          %vm951 = vcmp.eq.s32.totalorder %v889, %v911
          %vm952 = vcmp.eq.s32.totalorder %v890, %v911
          %vm953 = vcmp.eq.s32.totalorder %v889, %v914
          %vm954 = vcmp.eq.s32.totalorder %v890, %v914
          %vm955 = vcmp.eq.s32.totalorder %v889, %v917
          %vm956 = vcmp.eq.s32.totalorder %v890, %v917
          %vm957 = vcmp.eq.s32.totalorder %v889, %v920
          %vm958 = vcmp.eq.s32.totalorder %v890, %v920
          %vm959 = vcmp.eq.s32.totalorder %v889, %v923
          %vm960 = vcmp.eq.s32.totalorder %v890, %v923
          %vm961 = vcmp.eq.s32.totalorder %v889, %v926
          %vm962 = vcmp.eq.s32.totalorder %v890, %v926
          %vm963 = vcmp.eq.s32.totalorder %v889, %v929
          %vm964 = vcmp.eq.s32.totalorder %v890, %v929
          %vm965 = vcmp.eq.s32.totalorder %v889, %v932
          %vm966 = vcmp.eq.s32.totalorder %v890, %v932
          %vm967 = vcmp.eq.s32.totalorder %v889, %v935
          %vm968 = vcmp.eq.s32.totalorder %v890, %v935
          %vm969 = vcmp.eq.s32.totalorder %v889, %v938
          %vm970 = vcmp.eq.s32.totalorder %v890, %v938
          %v971 = vsel %vm939, %v853, 0.0
          %v972 = vsel %vm940, %v854, 0.0
          %v973 = vsel %vm941, %v855, 0.0
          %v974 = vsel %vm942, %v856, 0.0
          %v975 = vsel %vm943, %v857, 0.0
          %v976 = vsel %vm944, %v858, 0.0
          %v977 = vsel %vm945, %v859, 0.0
          %v978 = vsel %vm946, %v860, 0.0
          %v979 = vsel %vm947, %v861, 0.0
          %v980 = vsel %vm948, %v862, 0.0
          %v981 = vsel %vm949, %v863, 0.0
          %v982 = vsel %vm950, %v864, 0.0
          %v983 = vsel %vm951, %v865, 0.0
          %v984 = vsel %vm952, %v866, 0.0
          %v985 = vsel %vm953, %v867, 0.0
          %v986 = vsel %vm954, %v868, 0.0
          %v987 = vsel %vm955, %v869, 0.0
          %v988 = vsel %vm956, %v870, 0.0
          %v989 = vsel %vm957, %v871, 0.0
          %v990 = vsel %vm958, %v872, 0.0
          %v991 = vsel %vm959, %v873, 0.0
          %v992 = vsel %vm960, %v874, 0.0
          %v993 = vsel %vm961, %v875, 0.0
          %v994 = vsel %vm962, %v876, 0.0
          %v995 = vsel %vm963, %v877, 0.0
          %v996 = vsel %vm964, %v878, 0.0
          %v997 = vsel %vm965, %v879, 0.0
          %v998 = vsel %vm966, %v880, 0.0
          %v999 = vsel %vm967, %v881, 0.0
          %v1000 = vsel %vm968, %v882, 0.0
          %v1001 = vsel %vm969, %v883, 0.0
          %v1002 = vsel %vm970, %v884, 0.0
          %v1003 = vadd.f32 %v971, %v972
          %1004 = vadd.xlane.f32.xlu0 %v1003
          %v1005 = vpop.xlane.xlu0 %1004
          %v1006 = vadd.f32 %v973, %v974
          %1007 = vadd.xlane.f32.xlu0 %v1006
          %v1008 = vpop.xlane.xlu0 %1007
          %v1009 = vadd.f32 %v975, %v976
          %1010 = vadd.xlane.f32.xlu0 %v1009
          %v1011 = vpop.xlane.xlu0 %1010
          %v1012 = vadd.f32 %v977, %v978
          %1013 = vadd.xlane.f32.xlu0 %v1012
          %v1014 = vpop.xlane.xlu0 %1013
          %v1015 = vadd.f32 %v979, %v980
          %1016 = vadd.xlane.f32.xlu0 %v1015
          %v1017 = vpop.xlane.xlu0 %1016
          %v1018 = vadd.f32 %v981, %v982
          %1019 = vadd.xlane.f32.xlu0 %v1018
          %v1020 = vpop.xlane.xlu0 %1019
          %v1021 = vadd.f32 %v983, %v984
          %1022 = vadd.xlane.f32.xlu0 %v1021
          %v1023 = vpop.xlane.xlu0 %1022
          %v1024 = vadd.f32 %v985, %v986
          %1025 = vadd.xlane.f32.xlu0 %v1024
          %v1026 = vpop.xlane.xlu0 %1025
          %v1027 = vadd.f32 %v987, %v988
          %1028 = vadd.xlane.f32.xlu0 %v1027
          %v1029 = vpop.xlane.xlu0 %1028
          %v1030 = vadd.f32 %v989, %v990
          %1031 = vadd.xlane.f32.xlu0 %v1030
          %v1032 = vpop.xlane.xlu0 %1031
          %v1033 = vadd.f32 %v991, %v992
          %1034 = vadd.xlane.f32.xlu0 %v1033
          %v1035 = vpop.xlane.xlu0 %1034
          %v1036 = vadd.f32 %v993, %v994
          %1037 = vadd.xlane.f32.xlu0 %v1036
          %v1038 = vpop.xlane.xlu0 %1037
          %v1039 = vadd.f32 %v995, %v996
          %1040 = vadd.xlane.f32.xlu0 %v1039
          %v1041 = vpop.xlane.xlu0 %1040
          %v1042 = vadd.f32 %v997, %v998
          %1043 = vadd.xlane.f32.xlu0 %v1042
          %v1044 = vpop.xlane.xlu0 %1043
          %v1045 = vadd.f32 %v999, %v1000
          %1046 = vadd.xlane.f32.xlu0 %v1045
          %v1047 = vpop.xlane.xlu0 %1046
          %v1048 = vadd.f32 %v1001, %v1002
          %1049 = vadd.xlane.f32.xlu0 %v1048
          %v1050 = vpop.xlane.xlu0 %1049
          %v1051 = vadd.f32 %v816, %v1005
          %v1052 = vadd.f32 %v817, %v1008
          %v1053 = vadd.f32 %v818, %v1011
          %v1054 = vadd.f32 %v819, %v1014
          %v1055 = vadd.f32 %v820, %v1017
          %v1056 = vadd.f32 %v821, %v1020
          %v1057 = vadd.f32 %v822, %v1023
          %v1058 = vadd.f32 %v823, %v1026
          %v1059 = vadd.f32 %v824, %v1029
          %v1060 = vadd.f32 %v825, %v1032
          %v1061 = vadd.f32 %v826, %v1035
          %v1062 = vadd.f32 %v827, %v1038
          %v1063 = vadd.f32 %v828, %v1041
          %v1064 = vadd.f32 %v829, %v1044
          %v1065 = vadd.f32 %v830, %v1047
          %v1066 = vadd.f32 %v831, %v1050
          %v1067 = vmax.f32 %v853, %v854
          %1068 = vmax.xlane.f32.xlu0 %v1067
          %v1069 = vpop.xlane.xlu0 %1068
          %v1070 = vmax.f32 %v855, %v856
          %1071 = vmax.xlane.f32.xlu0 %v1070
          %v1072 = vpop.xlane.xlu0 %1071
          %v1073 = vmax.f32 %v857, %v858
          %1074 = vmax.xlane.f32.xlu0 %v1073
          %v1075 = vpop.xlane.xlu0 %1074
          %v1076 = vmax.f32 %v859, %v860
          %1077 = vmax.xlane.f32.xlu0 %v1076
          %v1078 = vpop.xlane.xlu0 %1077
          %v1079 = vmax.f32 %v861, %v862
          %1080 = vmax.xlane.f32.xlu0 %v1079
          %v1081 = vpop.xlane.xlu0 %1080
          %v1082 = vmax.f32 %v863, %v864
          %1083 = vmax.xlane.f32.xlu0 %v1082
          %v1084 = vpop.xlane.xlu0 %1083
          %v1085 = vmax.f32 %v865, %v866
          %1086 = vmax.xlane.f32.xlu0 %v1085
          %v1087 = vpop.xlane.xlu0 %1086
          %v1088 = vmax.f32 %v867, %v868
          %1089 = vmax.xlane.f32.xlu0 %v1088
          %v1090 = vpop.xlane.xlu0 %1089
          %v1091 = vmax.f32 %v869, %v870
          %1092 = vmax.xlane.f32.xlu0 %v1091
          %v1093 = vpop.xlane.xlu0 %1092
          %v1094 = vmax.f32 %v871, %v872
          %1095 = vmax.xlane.f32.xlu0 %v1094
          %v1096 = vpop.xlane.xlu0 %1095
          %v1097 = vmax.f32 %v873, %v874
          %1098 = vmax.xlane.f32.xlu0 %v1097
          %v1099 = vpop.xlane.xlu0 %1098
          %v1100 = vmax.f32 %v875, %v876
          %1101 = vmax.xlane.f32.xlu0 %v1100
          %v1102 = vpop.xlane.xlu0 %1101
          %v1103 = vmax.f32 %v877, %v878
          %1104 = vmax.xlane.f32.xlu0 %v1103
          %v1105 = vpop.xlane.xlu0 %1104
          %v1106 = vmax.f32 %v879, %v880
          %1107 = vmax.xlane.f32.xlu0 %v1106
          %v1108 = vpop.xlane.xlu0 %1107
          %v1109 = vmax.f32 %v881, %v882
          %1110 = vmax.xlane.f32.xlu0 %v1109
          %v1111 = vpop.xlane.xlu0 %1110
          %v1112 = vmax.f32 %v883, %v884
          %1113 = vmax.xlane.f32.xlu0 %v1112
          %v1114 = vpop.xlane.xlu0 %1113
          %v1115 = vmax.f32 %v784, %v1069
          %v1116 = vmax.f32 %v785, %v1072
          %v1117 = vmax.f32 %v786, %v1075
          %v1118 = vmax.f32 %v787, %v1078
          %v1119 = vmax.f32 %v788, %v1081
          %v1120 = vmax.f32 %v789, %v1084
          %v1121 = vmax.f32 %v790, %v1087
          %v1122 = vmax.f32 %v791, %v1090
          %v1123 = vmax.f32 %v792, %v1093
          %v1124 = vmax.f32 %v793, %v1096
          %v1125 = vmax.f32 %v794, %v1099
          %v1126 = vmax.f32 %v795, %v1102
          %v1127 = vmax.f32 %v796, %v1105
          %v1128 = vmax.f32 %v797, %v1108
          %v1129 = vmax.f32 %v798, %v1111
          %v1130 = vmax.f32 %v799, %v1114
          %v1131 = vsub.f32 %v784, %v1115
          %v1132 = vsub.f32 %v785, %v1116
          %v1133 = vsub.f32 %v786, %v1117
          %v1134 = vsub.f32 %v787, %v1118
          %v1135 = vsub.f32 %v788, %v1119
          %v1136 = vsub.f32 %v789, %v1120
          %v1137 = vsub.f32 %v790, %v1121
          %v1138 = vsub.f32 %v791, %v1122
          %v1139 = vsub.f32 %v792, %v1123
          %v1140 = vsub.f32 %v793, %v1124
          %v1141 = vsub.f32 %v794, %v1125
          %v1142 = vsub.f32 %v795, %v1126
          %v1143 = vsub.f32 %v796, %v1127
          %v1144 = vsub.f32 %v797, %v1128
          %v1145 = vsub.f32 %v798, %v1129
          %v1146 = vsub.f32 %v799, %v1130
          %v1147 = vmul.f32 %v1131, 1.442695
          %v1148 = vpow.pop %v1147
          %v1149 = vmul.f32 %v1132, 1.442695
          %v1150 = vpow.pop %v1149
          %v1151 = vmul.f32 %v1133, 1.442695
          %v1152 = vpow.pop %v1151
          %v1153 = vmul.f32 %v1134, 1.442695
          %v1154 = vpow.pop %v1153
          %v1155 = vmul.f32 %v1135, 1.442695
          %v1156 = vpow.pop %v1155
          %v1157 = vmul.f32 %v1136, 1.442695
          %v1158 = vpow.pop %v1157
          %v1159 = vmul.f32 %v1137, 1.442695
          %v1160 = vpow.pop %v1159
          %v1161 = vmul.f32 %v1138, 1.442695
          %v1162 = vpow.pop %v1161
          %v1163 = vmul.f32 %v1139, 1.442695
          %v1164 = vpow.pop %v1163
          %v1165 = vmul.f32 %v1140, 1.442695
          %v1166 = vpow.pop %v1165
          %v1167 = vmul.f32 %v1141, 1.442695
          %v1168 = vpow.pop %v1167
          %v1169 = vmul.f32 %v1142, 1.442695
          %v1170 = vpow.pop %v1169
          %v1171 = vmul.f32 %v1143, 1.442695
          %v1172 = vpow.pop %v1171
          %v1173 = vmul.f32 %v1144, 1.442695
          %v1174 = vpow.pop %v1173
          %v1175 = vmul.f32 %v1145, 1.442695
          %v1176 = vpow.pop %v1175
          %v1177 = vmul.f32 %v1146, 1.442695
          %v1178 = vpow.pop %v1177
          %v1179 = vmul.f32 %v800, %v1148
          %v1180 = vmul.f32 %v801, %v1150
          %v1181 = vmul.f32 %v802, %v1152
          %v1182 = vmul.f32 %v803, %v1154
          %v1183 = vmul.f32 %v804, %v1156
          %v1184 = vmul.f32 %v805, %v1158
          %v1185 = vmul.f32 %v806, %v1160
          %v1186 = vmul.f32 %v807, %v1162
          %v1187 = vmul.f32 %v808, %v1164
          %v1188 = vmul.f32 %v809, %v1166
          %v1189 = vmul.f32 %v810, %v1168
          %v1190 = vmul.f32 %v811, %v1170
          %v1191 = vmul.f32 %v812, %v1172
          %v1192 = vmul.f32 %v813, %v1174
          %v1193 = vmul.f32 %v814, %v1176
          %v1194 = vmul.f32 %v815, %v1178
          %v1195 = vsub.f32 %v853, %v1115
          %v1196 = vsub.f32 %v854, %v1115
          %v1197 = vsub.f32 %v855, %v1116
          %v1198 = vsub.f32 %v856, %v1116
          %v1199 = vsub.f32 %v857, %v1117
          %v1200 = vsub.f32 %v858, %v1117
          %v1201 = vsub.f32 %v859, %v1118
          %v1202 = vsub.f32 %v860, %v1118
          %v1203 = vsub.f32 %v861, %v1119
          %v1204 = vsub.f32 %v862, %v1119
          %v1205 = vsub.f32 %v863, %v1120
          %v1206 = vsub.f32 %v864, %v1120
          %v1207 = vsub.f32 %v865, %v1121
          %v1208 = vsub.f32 %v866, %v1121
          %v1209 = vsub.f32 %v867, %v1122
          %v1210 = vsub.f32 %v868, %v1122
          %v1211 = vsub.f32 %v869, %v1123
          %v1212 = vsub.f32 %v870, %v1123
          %v1213 = vsub.f32 %v871, %v1124
          %v1214 = vsub.f32 %v872, %v1124
          %v1215 = vsub.f32 %v873, %v1125
          %v1216 = vsub.f32 %v874, %v1125
          %v1217 = vsub.f32 %v875, %v1126
          %v1218 = vsub.f32 %v876, %v1126
          %v1219 = vsub.f32 %v877, %v1127
          %v1220 = vsub.f32 %v878, %v1127
          %v1221 = vsub.f32 %v879, %v1128
          %v1222 = vsub.f32 %v880, %v1128
          %v1223 = vsub.f32 %v881, %v1129
          %v1224 = vsub.f32 %v882, %v1129
          %v1225 = vsub.f32 %v883, %v1130
          %v1226 = vsub.f32 %v884, %v1130
          %v1227 = vmul.f32 %v1195, 1.442695
          %v1228 = vpow.pop %v1227
          %v1229 = vmul.f32 %v1196, 1.442695
          %v1230 = vpow.pop %v1229
          %v1231 = vmul.f32 %v1197, 1.442695
          %v1232 = vpow.pop %v1231
          %v1233 = vmul.f32 %v1198, 1.442695
          %v1234 = vpow.pop %v1233
          %v1235 = vmul.f32 %v1199, 1.442695
          %v1236 = vpow.pop %v1235
          %v1237 = vmul.f32 %v1200, 1.442695
          %v1238 = vpow.pop %v1237
          %v1239 = vmul.f32 %v1201, 1.442695
          %v1240 = vpow.pop %v1239
          %v1241 = vmul.f32 %v1202, 1.442695
          %v1242 = vpow.pop %v1241
          %v1243 = vmul.f32 %v1203, 1.442695
          %v1244 = vpow.pop %v1243
          %v1245 = vmul.f32 %v1204, 1.442695
          %v1246 = vpow.pop %v1245
          %v1247 = vmul.f32 %v1205, 1.442695
          %v1248 = vpow.pop %v1247
          %v1249 = vmul.f32 %v1206, 1.442695
          %v1250 = vpow.pop %v1249
          %v1251 = vmul.f32 %v1207, 1.442695
          %v1252 = vpow.pop %v1251
          %v1253 = vmul.f32 %v1208, 1.442695
          %v1254 = vpow.pop %v1253
          %v1255 = vmul.f32 %v1209, 1.442695
          %v1256 = vpow.pop %v1255
          %v1257 = vmul.f32 %v1210, 1.442695
          %v1258 = vpow.pop %v1257
          %v1259 = vmul.f32 %v1211, 1.442695
          %v1260 = vpow.pop %v1259
          %v1261 = vmul.f32 %v1212, 1.442695
          %v1262 = vpow.pop %v1261
          %v1263 = vmul.f32 %v1213, 1.442695
          %v1264 = vpow.pop %v1263
          %v1265 = vmul.f32 %v1214, 1.442695
          %v1266 = vpow.pop %v1265
          %v1267 = vmul.f32 %v1215, 1.442695
          %v1268 = vpow.pop %v1267
          %v1269 = vmul.f32 %v1216, 1.442695
          %v1270 = vpow.pop %v1269
          %v1271 = vmul.f32 %v1217, 1.442695
          %v1272 = vpow.pop %v1271
          %v1273 = vmul.f32 %v1218, 1.442695
          %v1274 = vpow.pop %v1273
          %v1275 = vmul.f32 %v1219, 1.442695
          %v1276 = vpow.pop %v1275
          %v1277 = vmul.f32 %v1220, 1.442695
          %v1278 = vpow.pop %v1277
          %v1279 = vmul.f32 %v1221, 1.442695
          %v1280 = vpow.pop %v1279
          %v1281 = vmul.f32 %v1222, 1.442695
          %v1282 = vpow.pop %v1281
          %v1283 = vmul.f32 %v1223, 1.442695
          %v1284 = vpow.pop %v1283
          %v1285 = vmul.f32 %v1224, 1.442695
          %v1286 = vpow.pop %v1285
          %v1287 = vmul.f32 %v1225, 1.442695
          %v1288 = vpow.pop %v1287
          %v1289 = vmul.f32 %v1226, 1.442695
          %v1290 = vpow.pop %v1289
          %v1291 = vadd.f32 %v1228, %v1230
          %1292 = vadd.xlane.f32.xlu0 %v1291
          %v1293 = vpop.xlane.xlu0 %1292
          %v1294 = vadd.f32 %v1232, %v1234
          %1295 = vadd.xlane.f32.xlu0 %v1294
          %v1296 = vpop.xlane.xlu0 %1295
          %v1297 = vadd.f32 %v1236, %v1238
          %1298 = vadd.xlane.f32.xlu0 %v1297
          %v1299 = vpop.xlane.xlu0 %1298
          %v1300 = vadd.f32 %v1240, %v1242
          %1301 = vadd.xlane.f32.xlu0 %v1300
          %v1302 = vpop.xlane.xlu0 %1301
          %v1303 = vadd.f32 %v1244, %v1246
          %1304 = vadd.xlane.f32.xlu0 %v1303
          %v1305 = vpop.xlane.xlu0 %1304
          %v1306 = vadd.f32 %v1248, %v1250
          %1307 = vadd.xlane.f32.xlu0 %v1306
          %v1308 = vpop.xlane.xlu0 %1307
          %v1309 = vadd.f32 %v1252, %v1254
          %1310 = vadd.xlane.f32.xlu0 %v1309
          %v1311 = vpop.xlane.xlu0 %1310
          %v1312 = vadd.f32 %v1256, %v1258
          %1313 = vadd.xlane.f32.xlu0 %v1312
          %v1314 = vpop.xlane.xlu0 %1313
          %v1315 = vadd.f32 %v1260, %v1262
          %1316 = vadd.xlane.f32.xlu0 %v1315
          %v1317 = vpop.xlane.xlu0 %1316
          %v1318 = vadd.f32 %v1264, %v1266
          %1319 = vadd.xlane.f32.xlu0 %v1318
          %v1320 = vpop.xlane.xlu0 %1319
          %v1321 = vadd.f32 %v1268, %v1270
          %1322 = vadd.xlane.f32.xlu0 %v1321
          %v1323 = vpop.xlane.xlu0 %1322
          %v1324 = vadd.f32 %v1272, %v1274
          %1325 = vadd.xlane.f32.xlu0 %v1324
          %v1326 = vpop.xlane.xlu0 %1325
          %v1327 = vadd.f32 %v1276, %v1278
          %1328 = vadd.xlane.f32.xlu0 %v1327
          %v1329 = vpop.xlane.xlu0 %1328
          %v1330 = vadd.f32 %v1280, %v1282
          %1331 = vadd.xlane.f32.xlu0 %v1330
          %v1332 = vpop.xlane.xlu0 %1331
          %v1333 = vadd.f32 %v1284, %v1286
          %1334 = vadd.xlane.f32.xlu0 %v1333
          %v1335 = vpop.xlane.xlu0 %1334
          %v1336 = vadd.f32 %v1288, %v1290
          %1337 = vadd.xlane.f32.xlu0 %v1336
          %v1338 = vpop.xlane.xlu0 %1337
          %v1339 = vadd.f32 %v1179, %v1293
          %v1340 = vadd.f32 %v1180, %v1296
          %v1341 = vadd.f32 %v1181, %v1299
          %v1342 = vadd.f32 %v1182, %v1302
          %v1343 = vadd.f32 %v1183, %v1305
          %v1344 = vadd.f32 %v1184, %v1308
          %v1345 = vadd.f32 %v1185, %v1311
          %v1346 = vadd.f32 %v1186, %v1314
          %v1347 = vadd.f32 %v1187, %v1317
          %v1348 = vadd.f32 %v1188, %v1320
          %v1349 = vadd.f32 %v1189, %v1323
          %v1350 = vadd.f32 %v1190, %v1326
          %v1351 = vadd.f32 %v1191, %v1329
          %v1352 = vadd.f32 %v1192, %v1332
          %v1353 = vadd.f32 %v1193, %v1335
          %v1354 = vadd.f32 %v1194, %v1338
        $region114: #{tpu_custom_call.1} parent=84 // loop_footer
          %s783 = sadd.s32 1, %s779
        $region115: #{tpu_custom_call.1} parent=84 // loop_footer_branch
          %778 = sbr.rel target = $region111
        $region116: #{tpu_custom_call.1} parent=84 // loop_exit
          _
        %v1355 = vlog2.pop %v800
        %v1356 = vmul.f32 %v1355, 0.6931472
        %v1357 = vlog2.pop %v801
        %v1358 = vmul.f32 %v1357, 0.6931472
        %v1359 = vlog2.pop %v802
        %v1360 = vmul.f32 %v1359, 0.6931472
        %v1361 = vlog2.pop %v803
        %v1362 = vmul.f32 %v1361, 0.6931472
        %v1363 = vlog2.pop %v804
        %v1364 = vmul.f32 %v1363, 0.6931472
        %v1365 = vlog2.pop %v805
        %v1366 = vmul.f32 %v1365, 0.6931472
        %v1367 = vlog2.pop %v806
        %v1368 = vmul.f32 %v1367, 0.6931472
        %v1369 = vlog2.pop %v807
        %v1370 = vmul.f32 %v1369, 0.6931472
        %v1371 = vlog2.pop %v808
        %v1372 = vmul.f32 %v1371, 0.6931472
        %v1373 = vlog2.pop %v809
        %v1374 = vmul.f32 %v1373, 0.6931472
        %v1375 = vlog2.pop %v810
        %v1376 = vmul.f32 %v1375, 0.6931472
        %v1377 = vlog2.pop %v811
        %v1378 = vmul.f32 %v1377, 0.6931472
        %v1379 = vlog2.pop %v812
        %v1380 = vmul.f32 %v1379, 0.6931472
        %v1381 = vlog2.pop %v813
        %v1382 = vmul.f32 %v1381, 0.6931472
        %v1383 = vlog2.pop %v814
        %v1384 = vmul.f32 %v1383, 0.6931472
        %v1385 = vlog2.pop %v815
        %v1386 = vmul.f32 %v1385, 0.6931472
        %v1387 = vadd.f32 %v784, %v1356
        %v1388 = vadd.f32 %v785, %v1358
        %v1389 = vadd.f32 %v786, %v1360
        %v1390 = vadd.f32 %v787, %v1362
        %v1391 = vadd.f32 %v788, %v1364
        %v1392 = vadd.f32 %v789, %v1366
        %v1393 = vadd.f32 %v790, %v1368
        %v1394 = vadd.f32 %v791, %v1370
        %v1395 = vadd.f32 %v792, %v1372
        %v1396 = vadd.f32 %v793, %v1374
        %v1397 = vadd.f32 %v794, %v1376
        %v1398 = vadd.f32 %v795, %v1378
        %v1399 = vadd.f32 %v796, %v1380
        %v1400 = vadd.f32 %v797, %v1382
        %v1401 = vadd.f32 %v798, %v1384
        %v1402 = vadd.f32 %v799, %v1386
        %v1403 = vsub.f32 %v1387, %v816
        %v1404 = vsub.f32 %v1388, %v817
        %v1405 = vsub.f32 %v1389, %v818
        %v1406 = vsub.f32 %v1390, %v819
        %v1407 = vsub.f32 %v1391, %v820
        %v1408 = vsub.f32 %v1392, %v821
        %v1409 = vsub.f32 %v1393, %v822
        %v1410 = vsub.f32 %v1394, %v823
        %v1411 = vsub.f32 %v1395, %v824
        %v1412 = vsub.f32 %v1396, %v825
        %v1413 = vsub.f32 %v1397, %v826
        %v1414 = vsub.f32 %v1398, %v827
        %v1415 = vsub.f32 %v1399, %v828
        %v1416 = vsub.f32 %v1400, %v829
        %v1417 = vsub.f32 %v1401, %v830
        %v1418 = vsub.f32 %v1402, %v831
        %vm1419 = vcmask 7168
        %v1420 = vsel %vm1419, %v1403, 0.0
        %v1421 = vsel %vm1419, %v1404, 0.0
        %v1422 = vadd.f32 %v1420, %v1421
        %v1423 = vsel %vm1419, %v1405, 0.0
        %v1424 = vadd.f32 %v1422, %v1423
        %v1425 = vsel %vm1419, %v1406, 0.0
        %v1426 = vadd.f32 %v1424, %v1425
        %v1427 = vsel %vm1419, %v1407, 0.0
        %v1428 = vadd.f32 %v1426, %v1427
        %v1429 = vsel %vm1419, %v1408, 0.0
        %v1430 = vadd.f32 %v1428, %v1429
        %v1431 = vsel %vm1419, %v1409, 0.0
        %v1432 = vadd.f32 %v1430, %v1431
        %v1433 = vsel %vm1419, %v1410, 0.0
        %v1434 = vadd.f32 %v1432, %v1433
        %v1435 = vsel %vm1419, %v1411, 0.0
        %v1436 = vadd.f32 %v1434, %v1435
        %v1437 = vsel %vm1419, %v1412, 0.0
        %v1438 = vadd.f32 %v1436, %v1437
        %v1439 = vsel %vm1419, %v1413, 0.0
        %v1440 = vadd.f32 %v1438, %v1439
        %v1441 = vsel %vm1419, %v1414, 0.0
        %v1442 = vadd.f32 %v1440, %v1441
        %v1443 = vsel %vm1419, %v1415, 0.0
        %v1444 = vadd.f32 %v1442, %v1443
        %v1445 = vsel %vm1419, %v1416, 0.0
        %v1446 = vadd.f32 %v1444, %v1445
        %v1447 = vsel %vm1419, %v1417, 0.0
        %v1448 = vadd.f32 %v1446, %v1447
        %v1449 = vsel %vm1419, %v1418, 0.0
        %v1450 = vadd.f32 %v1448, %v1449
        %1451 = vadd.xlane.f32.xlu0 %v1450
        %v1452 = vpop.xlane.xlu0 %1451
        %v1453 = vrot.slane %v1452, 4
        %v1454 = vadd.f32 %v1452, %v1453
        %v1455 = vrot.slane %v1454, 2
        %v1456 = vadd.f32 %v1454, %v1455
        %v1457 = vrot.slane %v1456, 1
        %v1458 = vadd.f32 %v1456, %v1457
        %s1459 = vtos %v1458
        %v1460 = vld [vmem:[%s628] sm:$0xf]
        %v1461 = vld [vmem:[%s628 + $0x4] sm:$0xf]
        %v1462 = vld [vmem:[%s628 + $0x8] sm:$0xf]
        %v1463 = vld [vmem:[%s628 + $0xc] sm:$0xf]
        %v1464 = vld [vmem:[%s628 + $0x10] sm:$0xf]
        %v1465 = vld [vmem:[%s628 + $0x14] sm:$0xf]
        %v1466 = vld [vmem:[%s628 + $0x18] sm:$0xf]
        %v1467 = vld [vmem:[%s628 + $0x1c] sm:$0xf]
        %v1468 = vld [vmem:[%s628 + $0x20] sm:$0xf]
        %v1469 = vld [vmem:[%s628 + $0x24] sm:$0xf]
        %v1470 = vld [vmem:[%s628 + $0x28] sm:$0xf]
        %v1471 = vld [vmem:[%s628 + $0x2c] sm:$0xf]
        %v1472 = vld [vmem:[%s628 + $0x30] sm:$0xf]
        %v1473 = vld [vmem:[%s628 + $0x34] sm:$0xf]
        %v1474 = vld [vmem:[%s628 + $0x38] sm:$0xf]
        %v1475 = vld [vmem:[%s628 + $0x3c] sm:$0xf]
        %v1476 = vld [vmem:[%s628 + $0x40] sm:$0xf]
        %v1477 = vld [vmem:[%s628 + $0x44] sm:$0xf]
        %v1478 = vld [vmem:[%s628 + $0x48] sm:$0xf]
        %v1479 = vld [vmem:[%s628 + $0x4c] sm:$0xf]
        %v1480 = vld [vmem:[%s628 + $0x50] sm:$0xf]
        %v1481 = vld [vmem:[%s628 + $0x54] sm:$0xf]
        %v1482 = vld [vmem:[%s628 + $0x58] sm:$0xf]
        %v1483 = vld [vmem:[%s628 + $0x5c] sm:$0xf]
        %v1484 = vld [vmem:[%s628 + $0x60] sm:$0xf]
        %v1485 = vld [vmem:[%s628 + $0x64] sm:$0xf]
        %v1486 = vld [vmem:[%s628 + $0x68] sm:$0xf]
        %v1487 = vld [vmem:[%s628 + $0x6c] sm:$0xf]
        %v1488 = vld [vmem:[%s628 + $0x70] sm:$0xf]
        %v1489 = vld [vmem:[%s628 + $0x74] sm:$0xf]
        %v1490 = vld [vmem:[%s628 + $0x78] sm:$0xf]
        %v1491 = vld [vmem:[%s628 + $0x7c] sm:$0xf]
        %v1492 = vunpack.c.l.bf16 %v1460
        %v1493 = vunpack.c.l.bf16 %v1461
        %v1494 = vunpack.c.l.bf16 %v1462
        %v1495 = vunpack.c.l.bf16 %v1463
        %v1496 = vunpack.c.l.bf16 %v1464
        %v1497 = vunpack.c.l.bf16 %v1465
        %v1498 = vunpack.c.l.bf16 %v1466
        %v1499 = vunpack.c.l.bf16 %v1467
        %v1500 = vunpack.c.l.bf16 %v1468
        %v1501 = vunpack.c.l.bf16 %v1469
        %v1502 = vunpack.c.l.bf16 %v1470
        %v1503 = vunpack.c.l.bf16 %v1471
        %v1504 = vunpack.c.l.bf16 %v1472
        %v1505 = vunpack.c.l.bf16 %v1473
        %v1506 = vunpack.c.l.bf16 %v1474
        %v1507 = vunpack.c.l.bf16 %v1475
        %v1508 = vunpack.c.l.bf16 %v1476
        %v1509 = vunpack.c.l.bf16 %v1477
        %v1510 = vunpack.c.l.bf16 %v1478
        %v1511 = vunpack.c.l.bf16 %v1479
        %v1512 = vunpack.c.l.bf16 %v1480
        %v1513 = vunpack.c.l.bf16 %v1481
        %v1514 = vunpack.c.l.bf16 %v1482
        %v1515 = vunpack.c.l.bf16 %v1483
        %v1516 = vunpack.c.l.bf16 %v1484
        %v1517 = vunpack.c.l.bf16 %v1485
        %v1518 = vunpack.c.l.bf16 %v1486
        %v1519 = vunpack.c.l.bf16 %v1487
        %v1520 = vunpack.c.l.bf16 %v1488
        %v1521 = vunpack.c.l.bf16 %v1489
        %v1522 = vunpack.c.l.bf16 %v1490
        %v1523 = vunpack.c.l.bf16 %v1491
        %1524 = vxpose.xlu0.b32.start [1/16] %v1492, 128
        %1525 = vxpose.xlu0.b32.cont [2/16] %v1493, 128
        %1526 = vxpose.xlu0.b32.cont [3/16] %v1494, 128
        %1527 = vxpose.xlu0.b32.cont [4/16] %v1495, 128
        %1528 = vxpose.xlu0.b32.cont [5/16] %v1496, 128
        %1529 = vxpose.xlu0.b32.cont [6/16] %v1497, 128
        %1530 = vxpose.xlu0.b32.cont [7/16] %v1498, 128
        %1531 = vxpose.xlu0.b32.cont [8/16] %v1499, 128
        %1532 = vxpose.xlu0.b32.cont [9/16] %v1500, 128
        %1533 = vxpose.xlu0.b32.cont [10/16] %v1501, 128
        %1534 = vxpose.xlu0.b32.cont [11/16] %v1502, 128
        %1535 = vxpose.xlu0.b32.cont [12/16] %v1503, 128
        %1536 = vxpose.xlu0.b32.cont [13/16] %v1504, 128
        %1537 = vxpose.xlu0.b32.cont [14/16] %v1505, 128
        %1538 = vxpose.xlu0.b32.cont [15/16] %v1506, 128
        %1539 = vxpose.xlu0.b32.end [16/16] %v1507, 128
        %v1540 = vpop.trf.xlu0
        %v1541 = vpop.trf.xlu0
        %v1542 = vpop.trf.xlu0
        %v1543 = vpop.trf.xlu0
        %v1544 = vpop.trf.xlu0
        %v1545 = vpop.trf.xlu0
        %v1546 = vpop.trf.xlu0
        %v1547 = vpop.trf.xlu0
        %v1548 = vpop.trf.xlu0
        %v1549 = vpop.trf.xlu0
        %v1550 = vpop.trf.xlu0
        %v1551 = vpop.trf.xlu0
        %v1552 = vpop.trf.xlu0
        %v1553 = vpop.trf.xlu0
        %v1554 = vpop.trf.xlu0
        %v1555 = vpop.trf.xlu0
        %1556 = vxpose.xlu0.b32.start [1/16] %v1508, 128
        %1557 = vxpose.xlu0.b32.cont [2/16] %v1509, 128
        %1558 = vxpose.xlu0.b32.cont [3/16] %v1510, 128
        %1559 = vxpose.xlu0.b32.cont [4/16] %v1511, 128
        %1560 = vxpose.xlu0.b32.cont [5/16] %v1512, 128
        %1561 = vxpose.xlu0.b32.cont [6/16] %v1513, 128
        %1562 = vxpose.xlu0.b32.cont [7/16] %v1514, 128
        %1563 = vxpose.xlu0.b32.cont [8/16] %v1515, 128
        %1564 = vxpose.xlu0.b32.cont [9/16] %v1516, 128
        %1565 = vxpose.xlu0.b32.cont [10/16] %v1517, 128
        %1566 = vxpose.xlu0.b32.cont [11/16] %v1518, 128
        %1567 = vxpose.xlu0.b32.cont [12/16] %v1519, 128
        %1568 = vxpose.xlu0.b32.cont [13/16] %v1520, 128
        %1569 = vxpose.xlu0.b32.cont [14/16] %v1521, 128
        %1570 = vxpose.xlu0.b32.cont [15/16] %v1522, 128
        %1571 = vxpose.xlu0.b32.end [16/16] %v1523, 128
        %v1572 = vpop.trf.xlu0
        %v1573 = vpop.trf.xlu0
        %v1574 = vpop.trf.xlu0
        %v1575 = vpop.trf.xlu0
        %v1576 = vpop.trf.xlu0
        %v1577 = vpop.trf.xlu0
        %v1578 = vpop.trf.xlu0
        %v1579 = vpop.trf.xlu0
        %v1580 = vpop.trf.xlu0
        %v1581 = vpop.trf.xlu0
        %v1582 = vpop.trf.xlu0
        %v1583 = vpop.trf.xlu0
        %v1584 = vpop.trf.xlu0
        %v1585 = vpop.trf.xlu0
        %v1586 = vpop.trf.xlu0
        %v1587 = vpop.trf.xlu0
        %v1588 = vld [vmem:[%s636] sm:$0xff]
        %v1589 = vld [vmem:[%s636 + $0x8] sm:$0xff]
        %v1590 = vld [vmem:[%s636 + $0x10] sm:$0xff]
        %v1591 = vld [vmem:[%s636 + $0x18] sm:$0xff]
        %v1592 = vld [vmem:[%s636 + $0x20] sm:$0xff]
        %v1593 = vld [vmem:[%s636 + $0x28] sm:$0xff]
        %v1594 = vld [vmem:[%s636 + $0x30] sm:$0xff]
        %v1595 = vld [vmem:[%s636 + $0x38] sm:$0xff]
        %v1596 = vld [vmem:[%s636 + $0x40] sm:$0xff]
        %v1597 = vld [vmem:[%s636 + $0x48] sm:$0xff]
        %v1598 = vld [vmem:[%s636 + $0x50] sm:$0xff]
        %v1599 = vld [vmem:[%s636 + $0x58] sm:$0xff]
        %v1600 = vld [vmem:[%s636 + $0x60] sm:$0xff]
        %v1601 = vld [vmem:[%s636 + $0x68] sm:$0xff]
        %v1602 = vld [vmem:[%s636 + $0x70] sm:$0xff]
        %v1603 = vld [vmem:[%s636 + $0x78] sm:$0xff]
        %v1604 = vunpack.c.l.bf16 %v1588
        %v1605 = vunpack.c.h.bf16 %v1588
        %v1606 = vunpack.c.l.bf16 %v1589
        %v1607 = vunpack.c.h.bf16 %v1589
        %v1608 = vunpack.c.l.bf16 %v1590
        %v1609 = vunpack.c.h.bf16 %v1590
        %v1610 = vunpack.c.l.bf16 %v1591
        %v1611 = vunpack.c.h.bf16 %v1591
        %v1612 = vunpack.c.l.bf16 %v1592
        %v1613 = vunpack.c.h.bf16 %v1592
        %v1614 = vunpack.c.l.bf16 %v1593
        %v1615 = vunpack.c.h.bf16 %v1593
        %v1616 = vunpack.c.l.bf16 %v1594
        %v1617 = vunpack.c.h.bf16 %v1594
        %v1618 = vunpack.c.l.bf16 %v1595
        %v1619 = vunpack.c.h.bf16 %v1595
        %v1620 = vunpack.c.l.bf16 %v1596
        %v1621 = vunpack.c.h.bf16 %v1596
        %v1622 = vunpack.c.l.bf16 %v1597
        %v1623 = vunpack.c.h.bf16 %v1597
        %v1624 = vunpack.c.l.bf16 %v1598
        %v1625 = vunpack.c.h.bf16 %v1598
        %v1626 = vunpack.c.l.bf16 %v1599
        %v1627 = vunpack.c.h.bf16 %v1599
        %v1628 = vunpack.c.l.bf16 %v1600
        %v1629 = vunpack.c.h.bf16 %v1600
        %v1630 = vunpack.c.l.bf16 %v1601
        %v1631 = vunpack.c.h.bf16 %v1601
        %v1632 = vunpack.c.l.bf16 %v1602
        %v1633 = vunpack.c.h.bf16 %v1602
        %v1634 = vunpack.c.l.bf16 %v1603
        %v1635 = vunpack.c.h.bf16 %v1603
        %v1636 = vmax.f32 %v1540, %v1604
        %v1637 = vmax.f32 %v1572, %v1605
        %v1638 = vmax.f32 %v1541, %v1606
        %v1639 = vmax.f32 %v1573, %v1607
        %v1640 = vmax.f32 %v1542, %v1608
        %v1641 = vmax.f32 %v1574, %v1609
        %v1642 = vmax.f32 %v1543, %v1610
        %v1643 = vmax.f32 %v1575, %v1611
        %v1644 = vmax.f32 %v1544, %v1612
        %v1645 = vmax.f32 %v1576, %v1613
        %v1646 = vmax.f32 %v1545, %v1614
        %v1647 = vmax.f32 %v1577, %v1615
        %v1648 = vmax.f32 %v1546, %v1616
        %v1649 = vmax.f32 %v1578, %v1617
        %v1650 = vmax.f32 %v1547, %v1618
        %v1651 = vmax.f32 %v1579, %v1619
        %v1652 = vmax.f32 %v1548, %v1620
        %v1653 = vmax.f32 %v1580, %v1621
        %v1654 = vmax.f32 %v1549, %v1622
        %v1655 = vmax.f32 %v1581, %v1623
        %v1656 = vmax.f32 %v1550, %v1624
        %v1657 = vmax.f32 %v1582, %v1625
        %v1658 = vmax.f32 %v1551, %v1626
        %v1659 = vmax.f32 %v1583, %v1627
        %v1660 = vmax.f32 %v1552, %v1628
        %v1661 = vmax.f32 %v1584, %v1629
        %v1662 = vmax.f32 %v1553, %v1630
        %v1663 = vmax.f32 %v1585, %v1631
        %v1664 = vmax.f32 %v1554, %v1632
        %v1665 = vmax.f32 %v1586, %v1633
        %v1666 = vmax.f32 %v1555, %v1634
        %v1667 = vmax.f32 %v1587, %v1635
        %v1668 = vld [vmem:[%s646] sm:$0xff]
        %v1669 = vld [vmem:[%s646 + $0x8] sm:$0xff]
        %v1670 = vld [vmem:[%s646 + $0x10] sm:$0xff]
        %v1671 = vld [vmem:[%s646 + $0x18] sm:$0xff]
        %v1672 = vld [vmem:[%s646 + $0x20] sm:$0xff]
        %v1673 = vld [vmem:[%s646 + $0x28] sm:$0xff]
        %v1674 = vld [vmem:[%s646 + $0x30] sm:$0xff]
        %v1675 = vld [vmem:[%s646 + $0x38] sm:$0xff]
        %v1676 = vld [vmem:[%s646 + $0x40] sm:$0xff]
        %v1677 = vld [vmem:[%s646 + $0x48] sm:$0xff]
        %v1678 = vld [vmem:[%s646 + $0x50] sm:$0xff]
        %v1679 = vld [vmem:[%s646 + $0x58] sm:$0xff]
        %v1680 = vld [vmem:[%s646 + $0x60] sm:$0xff]
        %v1681 = vld [vmem:[%s646 + $0x68] sm:$0xff]
        %v1682 = vld [vmem:[%s646 + $0x70] sm:$0xff]
        %v1683 = vld [vmem:[%s646 + $0x78] sm:$0xff]
        %v1684 = vld [vmem:[%s646 + $0x80] sm:$0xff]
        %v1685 = vld [vmem:[%s646 + $0x88] sm:$0xff]
        %v1686 = vld [vmem:[%s646 + $0x90] sm:$0xff]
        %v1687 = vld [vmem:[%s646 + $0x98] sm:$0xff]
        %v1688 = vld [vmem:[%s646 + $0xa0] sm:$0xff]
        %v1689 = vld [vmem:[%s646 + $0xa8] sm:$0xff]
        %v1690 = vld [vmem:[%s646 + $0xb0] sm:$0xff]
        %v1691 = vld [vmem:[%s646 + $0xb8] sm:$0xff]
        %v1692 = vld [vmem:[%s646 + $0xc0] sm:$0xff]
        %v1693 = vld [vmem:[%s646 + $0xc8] sm:$0xff]
        %v1694 = vld [vmem:[%s646 + $0xd0] sm:$0xff]
        %v1695 = vld [vmem:[%s646 + $0xd8] sm:$0xff]
        %v1696 = vld [vmem:[%s646 + $0xe0] sm:$0xff]
        %v1697 = vld [vmem:[%s646 + $0xe8] sm:$0xff]
        %v1698 = vld [vmem:[%s646 + $0xf0] sm:$0xff]
        %v1699 = vld [vmem:[%s646 + $0xf8] sm:$0xff]
        %v1700 = vmul.f32 %v1636, %v1668
        %v1701 = vmul.f32 %v1637, %v1669
        %v1702 = vmul.f32 %v1638, %v1670
        %v1703 = vmul.f32 %v1639, %v1671
        %v1704 = vmul.f32 %v1640, %v1672
        %v1705 = vmul.f32 %v1641, %v1673
        %v1706 = vmul.f32 %v1642, %v1674
        %v1707 = vmul.f32 %v1643, %v1675
        %v1708 = vmul.f32 %v1644, %v1676
        %v1709 = vmul.f32 %v1645, %v1677
        %v1710 = vmul.f32 %v1646, %v1678
        %v1711 = vmul.f32 %v1647, %v1679
        %v1712 = vmul.f32 %v1648, %v1680
        %v1713 = vmul.f32 %v1649, %v1681
        %v1714 = vmul.f32 %v1650, %v1682
        %v1715 = vmul.f32 %v1651, %v1683
        %v1716 = vmul.f32 %v1652, %v1684
        %v1717 = vmul.f32 %v1653, %v1685
        %v1718 = vmul.f32 %v1654, %v1686
        %v1719 = vmul.f32 %v1655, %v1687
        %v1720 = vmul.f32 %v1656, %v1688
        %v1721 = vmul.f32 %v1657, %v1689
        %v1722 = vmul.f32 %v1658, %v1690
        %v1723 = vmul.f32 %v1659, %v1691
        %v1724 = vmul.f32 %v1660, %v1692
        %v1725 = vmul.f32 %v1661, %v1693
        %v1726 = vmul.f32 %v1662, %v1694
        %v1727 = vmul.f32 %v1663, %v1695
        %v1728 = vmul.f32 %v1664, %v1696
        %v1729 = vmul.f32 %v1665, %v1697
        %v1730 = vmul.f32 %v1666, %v1698
        %v1731 = vmul.f32 %v1667, %v1699
        %v1732 = vadd.f32 %v1700, %v1701
        %v1733 = vadd.f32 %v1732, %v1702
        %v1734 = vadd.f32 %v1733, %v1703
        %v1735 = vadd.f32 %v1734, %v1704
        %v1736 = vadd.f32 %v1735, %v1705
        %v1737 = vadd.f32 %v1736, %v1706
        %v1738 = vadd.f32 %v1737, %v1707
        %v1739 = vadd.f32 %v1738, %v1708
        %v1740 = vadd.f32 %v1739, %v1709
        %v1741 = vadd.f32 %v1740, %v1710
        %v1742 = vadd.f32 %v1741, %v1711
        %v1743 = vadd.f32 %v1742, %v1712
        %v1744 = vadd.f32 %v1743, %v1713
        %v1745 = vadd.f32 %v1744, %v1714
        %v1746 = vadd.f32 %v1745, %v1715
        %v1747 = vadd.f32 %v1746, %v1716
        %v1748 = vadd.f32 %v1747, %v1717
        %v1749 = vadd.f32 %v1748, %v1718
        %v1750 = vadd.f32 %v1749, %v1719
        %v1751 = vadd.f32 %v1750, %v1720
        %v1752 = vadd.f32 %v1751, %v1721
        %v1753 = vadd.f32 %v1752, %v1722
        %v1754 = vadd.f32 %v1753, %v1723
        %v1755 = vadd.f32 %v1754, %v1724
        %v1756 = vadd.f32 %v1755, %v1725
        %v1757 = vadd.f32 %v1756, %v1726
        %v1758 = vadd.f32 %v1757, %v1727
        %v1759 = vadd.f32 %v1758, %v1728
        %v1760 = vadd.f32 %v1759, %v1729
        %v1761 = vadd.f32 %v1760, %v1730
        %v1762 = vadd.f32 %v1761, %v1731
        %1763 = vadd.xlane.f32.xlu0 %v1762
        %v1764 = vpop.xlane.xlu0 %1763
        %v1765 = vrot.slane %v1764, 4
        %v1766 = vadd.f32 %v1764, %v1765
        %v1767 = vrot.slane %v1766, 2
        %v1768 = vadd.f32 %v1766, %v1767
        %v1769 = vrot.slane %v1768, 1
        %v1770 = vadd.f32 %v1768, %v1769
        %s1771 = vtos %v1770
        %v1772 = vlaneseq
        %v1773 = vshrl.u32 %v1772, 7
        %vm1774 = vcmp.eq.s32.totalorder %v1773, 0
        %vm1775 = vcmp.eq.s32.totalorder %v1773, 1
        %vm1776 = vcmp.eq.s32.totalorder %v1773, 2
        %v1777 = vstv %s1771
        %v1778 = vsel %vm1776, %v1777, 0.0
        %v1779 = vstv %s1459
        %v1780 = vsel %vm1775, %v1779, %v1778
        %v1781 = vstv %s761
        %v1782 = vsel %vm1774, %v1781, %v1780
        %1783 = vst [vmem:[%s710] sm:$0xff] %v1782
        %s1784 = sand.u32 %s246, 1
        %s1785 = scalar_lea.sflag [#allocation4], %s1784
        %s1786 = sand.u32 %s246, 1
        %s1787 = smul.addr %s1786, 8
        %s1788 = scalar_lea.vmem [#allocation12], %s1787
        // Predicated region
        $region117: #{tpu_custom_call.1} parent=84 // pred_check
          %p1789 = pneg %p256
        $region118: #{tpu_custom_call.1} parent=84 // pred_check_branch
          %1791 = sbr.rel (%p1789) target = $region120
        $region119: #{tpu_custom_call.1} parent=84 // pred_region
          %1793 = vsyncadd %s1785, 0
          %s1794 = smul.addr %s34, 2
          %s1795 = sadd.s32 %s35, %s1794
          %s1796 = smul.addr %s1795, 8
          %s1797 = scalar_lea.hbm %s7, %s1796
          %s1799 = sshll.u32 %s1788, 4
          %s1800 = int_to_ptr.vmem [resolvable:$true] %s1799
          %s1801 = sshll.u32 %s1797, 4
          %s1802 = int_to_ptr.hbm [resolvable:$true] %s1801
          %1804 = dma.vmem_to_hbm [thread:$0]  %s1800, 128, %s1802, %s1785
        $region120: #{tpu_custom_call.1} parent=84 // pred_fallthru
          _
      $region85: #{tpu_custom_call.1} parent=5 // pred_fallthru
        _
      %p1805 = scmp.le.s32.totalorder 2, %s25
      // Predicated region
      $region121: #{tpu_custom_call.1} parent=5 // pred_check
        %p1806 = pneg %p1805
      $region122: #{tpu_custom_call.1} parent=5 // pred_check_branch
        %1808 = sbr.rel (%p1806) target = $region124
      $region123: #{tpu_custom_call.1} parent=5 // pred_region
        %s1809 = ssub.s32 %s25, 2
        // Predicated region
        $region125: #{tpu_custom_call.1} parent=123 // pred_check
          %p1810 = pneg %p262
        $region126: #{tpu_custom_call.1} parent=123 // pred_check_branch
          %1812 = sbr.rel (%p1810) target = $region128
        $region127: #{tpu_custom_call.1} parent=123 // pred_region
          %s1813 = sand.u32 %s247, 1
          %s1814 = scalar_lea.sflag [#allocation4], %s1813
          %s1815 = sand.u32 %s247, 1
          %s1816 = smul.addr %s1815, 8
          %s1817 = scalar_lea.vmem [#allocation12], %s1816
          %1819 = dma.done %s1814, 128
        $region128: #{tpu_custom_call.1} parent=123 // pred_fallthru
          _
      $region124: #{tpu_custom_call.1} parent=5 // pred_fallthru
        _
    $region6: #{tpu_custom_call.1} parent=1 // loop_footer
      %s29 = sadd.s32 1, %s25
    $region7: #{tpu_custom_call.1} parent=1 // loop_footer_branch
      %24 = sbr.rel target = $region3
    $region8: #{tpu_custom_call.1} parent=1 // loop_exit
      _
    %1820 = vsyncpa [#allocation3], 1
    %s1821 = scalar_lea.sflag [#allocation3], 1
    %1822 = vsyncpa %s1821, 1
    %1823 = vsyncpa [#allocation6], 1
    %s1824 = scalar_lea.sflag [#allocation6], 1
    %1825 = vsyncpa %s1824, 1
    %1826 = vsyncpa [#allocation10], 1
    %s1827 = scalar_lea.sflag [#allocation10], 1
    %1828 = vsyncpa %s1827, 1
    %1829 = vsyncpa [#allocation4], 1
    %s1830 = scalar_lea.sflag [#allocation4], 1
    %1831 = vsyncpa %s1830, 1

</llo_original>
